<compile_context>
chip_gen: v5e
topology: v5e:2x2
jax: 0.10.0
libtpu: 0.0.40
codegen_flags: <defaults>
</compile_context>

<pallas_src>
from functools import partial

import numpy as np
import jax
import jax.numpy as jnp
from jax.experimental import pallas as pl
from jax.experimental.pallas import tpu as pltpu


def _residual_block_kernel(x_ref, w1_ref, w2_ref, wskp_ref, pool_ref,
                           b1_ref, b2_ref, bsp_ref, alpha_ref,
                           out_ref,
                           acc1_ref, acc2_ref, resp_ref,
                           *, H, TDo, Ho, R1s, R2s):
    bf16 = jnp.bfloat16
    a1 = alpha_ref[0]
    a2 = alpha_ref[1]

    # x-row base of this output-depth slab: output d-slice 2*s*TDo starts reading
    # input d-slice 2*s*TDo, i.e. row 2*s*TDo*H.
    step = 2 * TDo * H
    rb = pl.multiple_of(pl.program_id(1) * step, step & -step)

    # ---- conv1 (3x3x3 valid) + PReLU: 9 banded (kd,kh)-tap matmuls, f32 acc ----
    acc1_ref[...] = jnp.broadcast_to(b1_ref[...], acc1_ref.shape)
    for t in range(9):
        kd, kh = divmod(t, 3)
        acc1_ref[...] += jnp.dot(
            x_ref[pl.ds(rb + kd * H + kh, R1s), :].astype(bf16), w1_ref[t],
            preferred_element_type=jnp.float32)
    h1 = acc1_ref[...]
    acc1_ref[...] = jnp.where(h1 >= 0.0, h1, a1 * h1)            # act1, in place

    # ---- conv2 (3x3x3 valid) + PReLU ----
    acc2_ref[...] = jnp.broadcast_to(b2_ref[...], acc2_ref.shape)
    for t in range(9):
        kd, kh = divmod(t, 3)
        acc2_ref[...] += jnp.dot(
            acc1_ref[pl.ds(kd * H + kh, R2s), :].astype(bf16), w2_ref[t],
            preferred_element_type=jnp.float32)
    h2 = acc2_ref[...]
    act2 = jnp.where(h2 >= 0.0, h2, a2 * h2)

    # ---- residual + pool-folded skip + W-direction 2x mean pool (one shot) ----
    # resp = pool_W(act2 + skip) = act2 @ pmat + x_crop @ (wsk @ pmat) + b_skip @ pmat
    resp_ref[...] = (
        jnp.dot(act2.astype(bf16), pool_ref[...],
                preferred_element_type=jnp.float32)
        + jnp.dot(x_ref[pl.ds(rb + 2 * H + 2, R2s), :].astype(bf16), wskp_ref[...],
                  preferred_element_type=jnp.float32)
        + bsp_ref[...])

    # ---- (d,h)-pair mean pool: only the surviving (even d, even h) rows formed ----
    for do in range(TDo):
        r0 = 2 * do * H
        out_ref[pl.ds(do * Ho, Ho), :] = (
            resp_ref[pl.ds(r0, Ho, stride=2), :]
            + resp_ref[pl.ds(r0 + 1, Ho, stride=2), :]
            + resp_ref[pl.ds(r0 + H, Ho, stride=2), :]
            + resp_ref[pl.ds(r0 + H + 1, Ho, stride=2), :])


def _banded_tap_weights(w, w_in, w_out):
    """Fold the kw taps of a (Cout, Cin, 3, 3, 3) conv weight into banded matrices
    on the W-fused lane layout; one matrix per (kd, kh) tap.
    Returns (9, w_in*Cin, w_out*Cout) float32."""
    taps = jnp.transpose(w, (2, 3, 4, 1, 0)).astype(jnp.float32)  # (kd,kh,kw,Cin,Cout)
    blocks = []
    for kd in range(3):
        for kh in range(3):
            blk = sum(jnp.kron(jnp.eye(w_in, w_out, k=-kw, dtype=jnp.float32),
                               taps[kd, kh, kw]) for kw in range(3))
            blocks.append(blk)
    return jnp.stack(blocks, axis=0)


def residual_block_forward(x, params, *, slab_do=1):
    """x: (N, Cin, D, H, W) float32, NCDHW (PyTorch convention)."""
    wskip, bskip, w1, b1, a1, w2, b2, a2 = params
    N, Cin, D, H, W = x.shape
    Cc = w1.shape[0]
    Cout = w2.shape[0]
    assert Cc == Cin and w1.shape[1] == Cin and w2.shape[1] == Cc
    assert D > 4 and H > 4 and W > 4
    # Even post-crop sizes: trilinear 0.5x with align_corners=False == 2x2x2 mean pool.
    assert (D - 4) % 2 == 0 and (H - 4) % 2 == 0 and (W - 4) % 2 == 0

    Do, Ho, Wo = (D - 4) // 2, (H - 4) // 2, (W - 4) // 2
    TDo = max(1, min(slab_do, Do))
    while Do % TDo:                     # largest divisor of Do that is <= slab_do
        TDo -= 1
    n_slabs = Do // TDo

    DH = D * H
    KC1 = W * Cin                       # x lane width
    KC2 = (W - 2) * Cc                  # act1 lane width
    NL = (W - 4) * Cout                 # conv2 output lane width (pre-pool)
    WoC = Wo * Cout                     # pooled output lane width
    R2s = (2 * TDo - 1) * H + 2 * Ho    # conv2/skip/resp rows per slab
    R1s = R2s + 2 * H + 2               # conv1 rows per slab
    # Deepest x-row read of the last slab (conv1 tap (2,2)) stays in range, and all
    # h-wrap garbage rows are never consumed by surviving (decimated) output rows.
    assert 2 * (Do - TDo) * H + R1s + 2 * H + 2 <= DH

    f32, bf16 = jnp.float32, jnp.bfloat16

    # ---- layout glue / weight folding (plain JAX, once per call) ----
    x2 = jnp.transpose(x, (0, 2, 3, 4, 1)).reshape(N, DH, KC1).astype(f32)
    w1p = _banded_tap_weights(w1, W, W - 2).astype(bf16)          # (9, KC1, KC2)
    w2p = _banded_tap_weights(w2, W - 2, W - 4).astype(bf16)      # (9, KC2, NL)
    # W-direction 2x mean pool (and the global 1/8) as a constant lane matmul.
    pmat = 0.125 * jnp.kron(jnp.repeat(jnp.eye(Wo, dtype=f32), 2, axis=0),
                            jnp.eye(Cout, dtype=f32))             # (NL, WoC)
    # 1x1 skip on crop(x, 2): banded weight, pre-folded with the pool matrix.
    wsk = jnp.kron(jnp.eye(W, W - 4, k=-2, dtype=f32),
                   jnp.transpose(wskip.reshape(Cout, Cin), (1, 0)).astype(f32))
    wskp = jnp.dot(wsk, pmat).astype(bf16)                        # (KC1, WoC)
    bias1 = jnp.tile(b1.astype(f32), W - 2).reshape(1, KC2)
    bias2 = jnp.tile(b2.astype(f32), W - 4).reshape(1, NL)
    bsp = jnp.dot(jnp.tile(bskip.astype(f32), W - 4).reshape(1, NL), pmat)  # (1, WoC)
    pmatb = pmat.astype(bf16)
    alphas = jnp.concatenate([jnp.reshape(a1, (1,)),
                              jnp.reshape(a2, (1,))]).astype(f32)

    kernel = partial(_residual_block_kernel,
                     H=H, TDo=TDo, Ho=Ho, R1s=R1s, R2s=R2s)

    out = pl.pallas_call(
        kernel,
        out_shape=jax.ShapeDtypeStruct((N, n_slabs, TDo * Ho, WoC), f32),
        grid=(N, n_slabs),
        in_specs=[
            # x stays resident across the slab axis (block index ignores s).
            # TODO(synk): for very large D*H*W*Cin, switch x to memory_space=pl.ANY
            # with a manually double-buffered, halo'd slab DMA (optionally bf16 via a
            # 2xbf16->u32 bitcast-packed copy path) so x is also O(slab) in VMEM.
            pl.BlockSpec((None, DH, KC1), lambda n, s: (n, 0, 0)),
            # TODO(synk): mark these grid-invariant weight/bias specs with
            # pipeline_mode=pl.Buffered(1) when big packed weights must not be
            # double-buffered on v7x's 64 MiB VMEM.
            pl.BlockSpec((9, KC1, KC2), lambda n, s: (0, 0, 0)),   # conv1 taps
            pl.BlockSpec((9, KC2, NL), lambda n, s: (0, 0, 0)),    # conv2 taps
            pl.BlockSpec((KC1, WoC), lambda n, s: (0, 0)),         # skip W (pool-folded)
            pl.BlockSpec((NL, WoC), lambda n, s: (0, 0)),          # pool matrix
            pl.BlockSpec((1, KC2), lambda n, s: (0, 0)),           # conv1 bias row
            pl.BlockSpec((1, NL), lambda n, s: (0, 0)),            # conv2 bias row
            pl.BlockSpec((1, WoC), lambda n, s: (0, 0)),           # skip bias (pooled)
            pl.BlockSpec(memory_space=pltpu.MemorySpace.SMEM),     # PReLU alphas
        ],
        out_specs=pl.BlockSpec((None, None, TDo * Ho, WoC),
                               lambda n, s: (n, s, 0, 0)),
        scratch_shapes=[
            pltpu.VMEM((R1s, KC2), f32),   # conv1 accumulator / act1 (slab-sized)
            pltpu.VMEM((R2s, NL), f32),    # conv2 accumulator (slab-sized)
            pltpu.VMEM((R2s, WoC), f32),   # W-pooled residual (slab-sized)
        ],
        compiler_params=pltpu.CompilerParams(
            dimension_semantics=("parallel", "arbitrary"),
            vmem_limit_bytes=48 * 1024 * 1024),
    )(x2, w1p, w2p, wskp, pmatb, bias1, bias2, bsp, alphas)

    # TODO(synk): at deployment ensure Wo*Cout is a multiple of 128 (or pack several
    # d-slabs / batch elements onto the lane dim) so the final stores are unmasked
    # lane-dense vst instead of masked partial stores.
    out = out.reshape(N, Do, Ho, Wo, Cout)
    return jnp.transpose(out, (0, 4, 1, 2, 3))                     # back to NCDHW


def reference_numpy(x, params):
    """float64 numpy reference matching PyTorch ResidualBlock.forward semantics."""
    wskip, bskip, w1, b1, a1, w2, b2, a2 = [np.asarray(p, np.float64) for p in params]
    x = np.asarray(x, np.float64)

    def conv3d(inp, w, b):
        _, _, D, H, W = inp.shape
        kd, kh, kw = w.shape[2:]
        Do, Ho, Wo = D - kd + 1, H - kh + 1, W - kw + 1
        out = np.zeros((inp.shape[0], w.shape[0], Do, Ho, Wo))
        for a_ in range(kd):
            for b_ in range(kh):
                for c_ in range(kw):
                    patch = inp[:, :, a_:a_ + Do, b_:b_ + Ho, c_:c_ + Wo]
                    out += np.einsum('ncdhw,oc->nodhw', patch, w[:, :, a_, b_, c_])
        return out + b.reshape(1, -1, 1, 1, 1)

    def prelu(v, a):
        return np.where(v >= 0, v, a * v)

    y = conv3d(x, wskip, bskip)
    y = y[:, :, 2:-2, 2:-2, 2:-2]                             # crop(y, 2)
    h = prelu(conv3d(x, w1, b1), a1)
    h = prelu(conv3d(h, w2, b2), a2)
    r = h + y
    N, C, D4, H4, W4 = r.shape
    # trilinear, scale 0.5, align_corners=False, even sizes -> 2x2x2 mean pool
    return r.reshape(N, C, D4 // 2, 2, H4 // 2, 2, W4 // 2, 2).mean(axis=(3, 5, 7))


if __name__ == "__main__":
    key = jax.random.PRNGKey(0)
    kx, k0, k1, k2, k3, k4, k5 = jax.random.split(key, 7)

    N, Cin, D, H, W = 2, 4, 8, 8, 8        # channels_curr=4, spatial=8
    Cout = 8                               # channels_next=8
    s = 0.1

    x = jax.random.normal(kx, (N, Cin, D, H, W), jnp.float32)
    wskip = jax.random.normal(k0, (Cout, Cin, 1, 1, 1), jnp.float32) * s
    bskip = jax.random.normal(k1, (Cout,), jnp.float32) * s
    w1 = jax.random.normal(k2, (Cin, Cin, 3, 3, 3), jnp.float32) * s
    b1 = jax.random.normal(k3, (Cin,), jnp.float32) * s
    w2 = jax.random.normal(k4, (Cout, Cin, 3, 3, 3), jnp.float32) * s
    b2 = jax.random.normal(k5, (Cout,), jnp.float32) * s
    a1 = jnp.float32(0.25)                 # nn.PReLU() default init
    a2 = jnp.float32(0.25)
    params = (wskip, bskip, w1, b1, a1, w2, b2, a2)

    fwd = jax.jit(residual_block_forward)
    out = jax.block_until_ready(fwd(x, params))

    ref = reference_numpy(np.asarray(x), params)
    assert out.shape == ref.shape == (N, Cout, (D - 4) // 2, (H - 4) // 2, (W - 4) // 2)
    err = float(np.max(np.abs(np.asarray(out, np.float64) - ref)))
    scale = float(np.max(np.abs(ref))) + 1e-6
    assert err <= 2e-2 * scale, f"max abs err {err} vs ref scale {scale}"

    print("KERNEL_OK")
</pallas_src>

<mosaic_0001>
module attributes {stable_mosaic.version = 11 : i64} {
  func.func @_residual_block_kernel(%arg0: i32, %arg1: i32, %arg2: memref<1x64x32xf32, #tpu.memory_space<vmem>>, %arg3: memref<9x32x24xbf16, #tpu.memory_space<vmem>>, %arg4: memref<9x24x32xbf16, #tpu.memory_space<vmem>>, %arg5: memref<32x16xbf16, #tpu.memory_space<vmem>>, %arg6: memref<32x16xbf16, #tpu.memory_space<vmem>>, %arg7: memref<1x24xf32, #tpu.memory_space<vmem>>, %arg8: memref<1x32xf32, #tpu.memory_space<vmem>>, %arg9: memref<1x16xf32, #tpu.memory_space<vmem>>, %arg10: memref<2xf32, #tpu.memory_space<smem>>, %arg11: memref<1x1x2x16xf32, #tpu.memory_space<vmem>>, %arg12: memref<30x24xf32, #tpu.memory_space<vmem>>, %arg13: memref<12x32xf32, #tpu.memory_space<vmem>>, %arg14: memref<12x16xf32, #tpu.memory_space<vmem>>) attributes {dimension_semantics = [#tpu.dimension_semantics<parallel>, #tpu.dimension_semantics<arbitrary>], iteration_bounds = array<i64: 2, 2>, scalar_prefetch = 0 : i64, scratch_operands = 3 : i64, tpu.core_type = #tpu.core_type<tc>, window_params = [{transform_indices = @transform_0, window_bounds = array<i64: 1, 64, 32>}, {pipeline_mode = #tpu.pipeline_mode<synchronous>, transform_indices = @transform_1, window_bounds = array<i64: 9, 32, 24>}, {pipeline_mode = #tpu.pipeline_mode<synchronous>, transform_indices = @transform_2, window_bounds = array<i64: 9, 24, 32>}, {pipeline_mode = #tpu.pipeline_mode<synchronous>, transform_indices = @transform_3, window_bounds = array<i64: 32, 16>}, {pipeline_mode = #tpu.pipeline_mode<synchronous>, transform_indices = @transform_4, window_bounds = array<i64: 32, 16>}, {pipeline_mode = #tpu.pipeline_mode<synchronous>, transform_indices = @transform_5, window_bounds = array<i64: 1, 24>}, {pipeline_mode = #tpu.pipeline_mode<synchronous>, transform_indices = @transform_6, window_bounds = array<i64: 1, 32>}, {pipeline_mode = #tpu.pipeline_mode<synchronous>, transform_indices = @transform_7, window_bounds = array<i64: 1, 16>}, {transform_indices = @transform_8, window_bounds = array<i64: 2>}, {transform_indices = @transform_9, window_bounds = array<i64: 1, 1, 2, 16>}]} {
    %c0 = arith.constant 0 : index
    %0 = memref.load %arg10[%c0] : memref<2xf32, #tpu.memory_space<smem>>
    %c1 = arith.constant 1 : index
    %1 = memref.load %arg10[%c1] : memref<2xf32, #tpu.memory_space<smem>>
    %c16_i32 = arith.constant 16 : i32
    %2 = arith.muli %arg1, %c16_i32 : i32
    %3 = tpu.assume_multiple %2, 16 : i32
    %c0_0 = arith.constant 0 : index
    %c0_1 = arith.constant 0 : index
    %4 = vector.load %arg7[%c0_0, %c0_1] : memref<1x24xf32, #tpu.memory_space<vmem>>, vector<1x24xf32>
    %5 = vector.shape_cast %4 : vector<1x24xf32> to vector<1x24xf32>
    %6 = vector.broadcast %5 : vector<1x24xf32> to vector<30x24xf32>
    %c0_2 = arith.constant 0 : index
    %c0_3 = arith.constant 0 : index
    %7 = vector.load %arg12[%c0_2, %c0_3] : memref<30x24xf32, #tpu.memory_space<vmem>>, vector<30x24xf32>
    tpu.vector_store %arg12[%c0_2, %c0_3], %6 {strides = array<i32>} : memref<30x24xf32, #tpu.memory_space<vmem>>, vector<30x24xf32>,
    %c0_4 = arith.constant 0 : index
    %c0_5 = arith.constant 0 : index
    %8 = vector.load %arg12[%c0_4, %c0_5] : memref<30x24xf32, #tpu.memory_space<vmem>>, vector<30x24xf32>
    %c0_i32 = arith.constant 0 : i32
    %9 = arith.addi %3, %c0_i32 : i32
    %c0_i32_6 = arith.constant 0 : i32
    %10 = arith.addi %9, %c0_i32_6 : i32
    %c0_7 = arith.constant 0 : index
    %11 = arith.index_cast %10 : i32 to index
    %c0_8 = arith.constant 0 : index
    %12 = vector.load %arg2[%c0_7, %11, %c0_8] : memref<1x64x32xf32, #tpu.memory_space<vmem>>, vector<1x30x32xf32>
    %13 = vector.shape_cast %12 : vector<1x30x32xf32> to vector<30x32xf32>
    %14 = arith.truncf %13 : vector<30x32xf32> to vector<30x32xbf16>
    %c0_9 = arith.constant 0 : index
    %c0_10 = arith.constant 0 : index
    %c0_11 = arith.constant 0 : index
    %15 = vector.load %arg3[%c0_9, %c0_10, %c0_11] : memref<9x32x24xbf16, #tpu.memory_space<vmem>>, vector<1x32x24xbf16>
    %16 = vector.shape_cast %15 : vector<1x32x24xbf16> to vector<32x24xbf16>
    %cst = arith.constant dense<0.000000e+00> : vector<30x24xf32>
    %17 = tpu.matmul %14, %16, %cst {dimension_numbers = #tpu.dot_dimension_numbers<[1], [0], [0], [1], [0, 0, 1, 1], [], []>} : vector<30x32xbf16>, vector<32x24xbf16>, vector<30x24xf32> -> vector<30x24xf32>
    %18 = arith.addf %8, %17 : vector<30x24xf32>
    %c0_12 = arith.constant 0 : index
    %c0_13 = arith.constant 0 : index
    %19 = vector.load %arg12[%c0_12, %c0_13] : memref<30x24xf32, #tpu.memory_space<vmem>>, vector<30x24xf32>
    tpu.vector_store %arg12[%c0_12, %c0_13], %18 {strides = array<i32>} : memref<30x24xf32, #tpu.memory_space<vmem>>, vector<30x24xf32>,
    %c0_14 = arith.constant 0 : index
    %c0_15 = arith.constant 0 : index
    %20 = vector.load %arg12[%c0_14, %c0_15] : memref<30x24xf32, #tpu.memory_space<vmem>>, vector<30x24xf32>
    %c0_i32_16 = arith.constant 0 : i32
    %21 = arith.addi %3, %c0_i32_16 : i32
    %c1_i32 = arith.constant 1 : i32
    %22 = arith.addi %21, %c1_i32 : i32
    %c0_17 = arith.constant 0 : index
    %23 = arith.index_cast %22 : i32 to index
    %c0_18 = arith.constant 0 : index
    %24 = vector.load %arg2[%c0_17, %23, %c0_18] : memref<1x64x32xf32, #tpu.memory_space<vmem>>, vector<1x30x32xf32>
    %25 = vector.shape_cast %24 : vector<1x30x32xf32> to vector<30x32xf32>
    %26 = arith.truncf %25 : vector<30x32xf32> to vector<30x32xbf16>
    %c1_19 = arith.constant 1 : index
    %c0_20 = arith.constant 0 : index
    %c0_21 = arith.constant 0 : index
    %27 = vector.load %arg3[%c1_19, %c0_20, %c0_21] : memref<9x32x24xbf16, #tpu.memory_space<vmem>>, vector<1x32x24xbf16>
    %28 = vector.shape_cast %27 : vector<1x32x24xbf16> to vector<32x24xbf16>
    %cst_22 = arith.constant dense<0.000000e+00> : vector<30x24xf32>
    %29 = tpu.matmul %26, %28, %cst_22 {dimension_numbers = #tpu.dot_dimension_numbers<[1], [0], [0], [1], [0, 0, 1, 1], [], []>} : vector<30x32xbf16>, vector<32x24xbf16>, vector<30x24xf32> -> vector<30x24xf32>
    %30 = arith.addf %20, %29 : vector<30x24xf32>
    %c0_23 = arith.constant 0 : index
    %c0_24 = arith.constant 0 : index
    %31 = vector.load %arg12[%c0_23, %c0_24] : memref<30x24xf32, #tpu.memory_space<vmem>>, vector<30x24xf32>
    tpu.vector_store %arg12[%c0_23, %c0_24], %30 {strides = array<i32>} : memref<30x24xf32, #tpu.memory_space<vmem>>, vector<30x24xf32>,
    %c0_25 = arith.constant 0 : index
    %c0_26 = arith.constant 0 : index
    %32 = vector.load %arg12[%c0_25, %c0_26] : memref<30x24xf32, #tpu.memory_space<vmem>>, vector<30x24xf32>
    %c0_i32_27 = arith.constant 0 : i32
    %33 = arith.addi %3, %c0_i32_27 : i32
    %c2_i32 = arith.constant 2 : i32
    %34 = arith.addi %33, %c2_i32 : i32
    %c0_28 = arith.constant 0 : index
    %35 = arith.index_cast %34 : i32 to index
    %c0_29 = arith.constant 0 : index
    %36 = vector.load %arg2[%c0_28, %35, %c0_29] : memref<1x64x32xf32, #tpu.memory_space<vmem>>, vector<1x30x32xf32>
    %37 = vector.shape_cast %36 : vector<1x30x32xf32> to vector<30x32xf32>
    %38 = arith.truncf %37 : vector<30x32xf32> to vector<30x32xbf16>
    %c2 = arith.constant 2 : index
    %c0_30 = arith.constant 0 : index
    %c0_31 = arith.constant 0 : index
    %39 = vector.load %arg3[%c2, %c0_30, %c0_31] : memref<9x32x24xbf16, #tpu.memory_space<vmem>>, vector<1x32x24xbf16>
    %40 = vector.shape_cast %39 : vector<1x32x24xbf16> to vector<32x24xbf16>
    %cst_32 = arith.constant dense<0.000000e+00> : vector<30x24xf32>
    %41 = tpu.matmul %38, %40, %cst_32 {dimension_numbers = #tpu.dot_dimension_numbers<[1], [0], [0], [1], [0, 0, 1, 1], [], []>} : vector<30x32xbf16>, vector<32x24xbf16>, vector<30x24xf32> -> vector<30x24xf32>
    %42 = arith.addf %32, %41 : vector<30x24xf32>
    %c0_33 = arith.constant 0 : index
    %c0_34 = arith.constant 0 : index
    %43 = vector.load %arg12[%c0_33, %c0_34] : memref<30x24xf32, #tpu.memory_space<vmem>>, vector<30x24xf32>
    tpu.vector_store %arg12[%c0_33, %c0_34], %42 {strides = array<i32>} : memref<30x24xf32, #tpu.memory_space<vmem>>, vector<30x24xf32>,
    %c0_35 = arith.constant 0 : index
    %c0_36 = arith.constant 0 : index
    %44 = vector.load %arg12[%c0_35, %c0_36] : memref<30x24xf32, #tpu.memory_space<vmem>>, vector<30x24xf32>
    %c8_i32 = arith.constant 8 : i32
    %45 = arith.addi %3, %c8_i32 : i32
    %c0_i32_37 = arith.constant 0 : i32
    %46 = arith.addi %45, %c0_i32_37 : i32
    %c0_38 = arith.constant 0 : index
    %47 = arith.index_cast %46 : i32 to index
    %c0_39 = arith.constant 0 : index
    %48 = vector.load %arg2[%c0_38, %47, %c0_39] : memref<1x64x32xf32, #tpu.memory_space<vmem>>, vector<1x30x32xf32>
    %49 = vector.shape_cast %48 : vector<1x30x32xf32> to vector<30x32xf32>
    %50 = arith.truncf %49 : vector<30x32xf32> to vector<30x32xbf16>
    %c3 = arith.constant 3 : index
    %c0_40 = arith.constant 0 : index
    %c0_41 = arith.constant 0 : index
    %51 = vector.load %arg3[%c3, %c0_40, %c0_41] : memref<9x32x24xbf16, #tpu.memory_space<vmem>>, vector<1x32x24xbf16>
    %52 = vector.shape_cast %51 : vector<1x32x24xbf16> to vector<32x24xbf16>
    %cst_42 = arith.constant dense<0.000000e+00> : vector<30x24xf32>
    %53 = tpu.matmul %50, %52, %cst_42 {dimension_numbers = #tpu.dot_dimension_numbers<[1], [0], [0], [1], [0, 0, 1, 1], [], []>} : vector<30x32xbf16>, vector<32x24xbf16>, vector<30x24xf32> -> vector<30x24xf32>
    %54 = arith.addf %44, %53 : vector<30x24xf32>
    %c0_43 = arith.constant 0 : index
    %c0_44 = arith.constant 0 : index
    %55 = vector.load %arg12[%c0_43, %c0_44] : memref<30x24xf32, #tpu.memory_space<vmem>>, vector<30x24xf32>
    tpu.vector_store %arg12[%c0_43, %c0_44], %54 {strides = array<i32>} : memref<30x24xf32, #tpu.memory_space<vmem>>, vector<30x24xf32>,
    %c0_45 = arith.constant 0 : index
    %c0_46 = arith.constant 0 : index
    %56 = vector.load %arg12[%c0_45, %c0_46] : memref<30x24xf32, #tpu.memory_space<vmem>>, vector<30x24xf32>
    %c8_i32_47 = arith.constant 8 : i32
    %57 = arith.addi %3, %c8_i32_47 : i32
    %c1_i32_48 = arith.constant 1 : i32
    %58 = arith.addi %57, %c1_i32_48 : i32
    %c0_49 = arith.constant 0 : index
    %59 = arith.index_cast %58 : i32 to index
    %c0_50 = arith.constant 0 : index
    %60 = vector.load %arg2[%c0_49, %59, %c0_50] : memref<1x64x32xf32, #tpu.memory_space<vmem>>, vector<1x30x32xf32>
    %61 = vector.shape_cast %60 : vector<1x30x32xf32> to vector<30x32xf32>
    %62 = arith.truncf %61 : vector<30x32xf32> to vector<30x32xbf16>
    %c4 = arith.constant 4 : index
    %c0_51 = arith.constant 0 : index
    %c0_52 = arith.constant 0 : index
    %63 = vector.load %arg3[%c4, %c0_51, %c0_52] : memref<9x32x24xbf16, #tpu.memory_space<vmem>>, vector<1x32x24xbf16>
    %64 = vector.shape_cast %63 : vector<1x32x24xbf16> to vector<32x24xbf16>
    %cst_53 = arith.constant dense<0.000000e+00> : vector<30x24xf32>
    %65 = tpu.matmul %62, %64, %cst_53 {dimension_numbers = #tpu.dot_dimension_numbers<[1], [0], [0], [1], [0, 0, 1, 1], [], []>} : vector<30x32xbf16>, vector<32x24xbf16>, vector<30x24xf32> -> vector<30x24xf32>
    %66 = arith.addf %56, %65 : vector<30x24xf32>
    %c0_54 = arith.constant 0 : index
    %c0_55 = arith.constant 0 : index
    %67 = vector.load %arg12[%c0_54, %c0_55] : memref<30x24xf32, #tpu.memory_space<vmem>>, vector<30x24xf32>
    tpu.vector_store %arg12[%c0_54, %c0_55], %66 {strides = array<i32>} : memref<30x24xf32, #tpu.memory_space<vmem>>, vector<30x24xf32>,
    %c0_56 = arith.constant 0 : index
    %c0_57 = arith.constant 0 : index
    %68 = vector.load %arg12[%c0_56, %c0_57] : memref<30x24xf32, #tpu.memory_space<vmem>>, vector<30x24xf32>
    %c8_i32_58 = arith.constant 8 : i32
    %69 = arith.addi %3, %c8_i32_58 : i32
    %c2_i32_59 = arith.constant 2 : i32
    %70 = arith.addi %69, %c2_i32_59 : i32
    %c0_60 = arith.constant 0 : index
    %71 = arith.index_cast %70 : i32 to index
    %c0_61 = arith.constant 0 : index
    %72 = vector.load %arg2[%c0_60, %71, %c0_61] : memref<1x64x32xf32, #tpu.memory_space<vmem>>, vector<1x30x32xf32>
    %73 = vector.shape_cast %72 : vector<1x30x32xf32> to vector<30x32xf32>
    %74 = arith.truncf %73 : vector<30x32xf32> to vector<30x32xbf16>
    %c5 = arith.constant 5 : index
    %c0_62 = arith.constant 0 : index
    %c0_63 = arith.constant 0 : index
    %75 = vector.load %arg3[%c5, %c0_62, %c0_63] : memref<9x32x24xbf16, #tpu.memory_space<vmem>>, vector<1x32x24xbf16>
    %76 = vector.shape_cast %75 : vector<1x32x24xbf16> to vector<32x24xbf16>
    %cst_64 = arith.constant dense<0.000000e+00> : vector<30x24xf32>
    %77 = tpu.matmul %74, %76, %cst_64 {dimension_numbers = #tpu.dot_dimension_numbers<[1], [0], [0], [1], [0, 0, 1, 1], [], []>} : vector<30x32xbf16>, vector<32x24xbf16>, vector<30x24xf32> -> vector<30x24xf32>
    %78 = arith.addf %68, %77 : vector<30x24xf32>
    %c0_65 = arith.constant 0 : index
    %c0_66 = arith.constant 0 : index
    %79 = vector.load %arg12[%c0_65, %c0_66] : memref<30x24xf32, #tpu.memory_space<vmem>>, vector<30x24xf32>
    tpu.vector_store %arg12[%c0_65, %c0_66], %78 {strides = array<i32>} : memref<30x24xf32, #tpu.memory_space<vmem>>, vector<30x24xf32>,
    %c0_67 = arith.constant 0 : index
    %c0_68 = arith.constant 0 : index
    %80 = vector.load %arg12[%c0_67, %c0_68] : memref<30x24xf32, #tpu.memory_space<vmem>>, vector<30x24xf32>
    %c16_i32_69 = arith.constant 16 : i32
    %81 = arith.addi %3, %c16_i32_69 : i32
    %c0_i32_70 = arith.constant 0 : i32
    %82 = arith.addi %81, %c0_i32_70 : i32
    %c0_71 = arith.constant 0 : index
    %83 = arith.index_cast %82 : i32 to index
    %c0_72 = arith.constant 0 : index
    %84 = vector.load %arg2[%c0_71, %83, %c0_72] : memref<1x64x32xf32, #tpu.memory_space<vmem>>, vector<1x30x32xf32>
    %85 = vector.shape_cast %84 : vector<1x30x32xf32> to vector<30x32xf32>
    %86 = arith.truncf %85 : vector<30x32xf32> to vector<30x32xbf16>
    %c6 = arith.constant 6 : index
    %c0_73 = arith.constant 0 : index
    %c0_74 = arith.constant 0 : index
    %87 = vector.load %arg3[%c6, %c0_73, %c0_74] : memref<9x32x24xbf16, #tpu.memory_space<vmem>>, vector<1x32x24xbf16>
    %88 = vector.shape_cast %87 : vector<1x32x24xbf16> to vector<32x24xbf16>
    %cst_75 = arith.constant dense<0.000000e+00> : vector<30x24xf32>
    %89 = tpu.matmul %86, %88, %cst_75 {dimension_numbers = #tpu.dot_dimension_numbers<[1], [0], [0], [1], [0, 0, 1, 1], [], []>} : vector<30x32xbf16>, vector<32x24xbf16>, vector<30x24xf32> -> vector<30x24xf32>
    %90 = arith.addf %80, %89 : vector<30x24xf32>
    %c0_76 = arith.constant 0 : index
    %c0_77 = arith.constant 0 : index
    %91 = vector.load %arg12[%c0_76, %c0_77] : memref<30x24xf32, #tpu.memory_space<vmem>>, vector<30x24xf32>
    tpu.vector_store %arg12[%c0_76, %c0_77], %90 {strides = array<i32>} : memref<30x24xf32, #tpu.memory_space<vmem>>, vector<30x24xf32>,
    %c0_78 = arith.constant 0 : index
    %c0_79 = arith.constant 0 : index
    %92 = vector.load %arg12[%c0_78, %c0_79] : memref<30x24xf32, #tpu.memory_space<vmem>>, vector<30x24xf32>
    %c16_i32_80 = arith.constant 16 : i32
    %93 = arith.addi %3, %c16_i32_80 : i32
    %c1_i32_81 = arith.constant 1 : i32
    %94 = arith.addi %93, %c1_i32_81 : i32
    %c0_82 = arith.constant 0 : index
    %95 = arith.index_cast %94 : i32 to index
    %c0_83 = arith.constant 0 : index
    %96 = vector.load %arg2[%c0_82, %95, %c0_83] : memref<1x64x32xf32, #tpu.memory_space<vmem>>, vector<1x30x32xf32>
    %97 = vector.shape_cast %96 : vector<1x30x32xf32> to vector<30x32xf32>
    %98 = arith.truncf %97 : vector<30x32xf32> to vector<30x32xbf16>
    %c7 = arith.constant 7 : index
    %c0_84 = arith.constant 0 : index
    %c0_85 = arith.constant 0 : index
    %99 = vector.load %arg3[%c7, %c0_84, %c0_85] : memref<9x32x24xbf16, #tpu.memory_space<vmem>>, vector<1x32x24xbf16>
    %100 = vector.shape_cast %99 : vector<1x32x24xbf16> to vector<32x24xbf16>
    %cst_86 = arith.constant dense<0.000000e+00> : vector<30x24xf32>
    %101 = tpu.matmul %98, %100, %cst_86 {dimension_numbers = #tpu.dot_dimension_numbers<[1], [0], [0], [1], [0, 0, 1, 1], [], []>} : vector<30x32xbf16>, vector<32x24xbf16>, vector<30x24xf32> -> vector<30x24xf32>
    %102 = arith.addf %92, %101 : vector<30x24xf32>
    %c0_87 = arith.constant 0 : index
    %c0_88 = arith.constant 0 : index
    %103 = vector.load %arg12[%c0_87, %c0_88] : memref<30x24xf32, #tpu.memory_space<vmem>>, vector<30x24xf32>
    tpu.vector_store %arg12[%c0_87, %c0_88], %102 {strides = array<i32>} : memref<30x24xf32, #tpu.memory_space<vmem>>, vector<30x24xf32>,
    %c0_89 = arith.constant 0 : index
    %c0_90 = arith.constant 0 : index
    %104 = vector.load %arg12[%c0_89, %c0_90] : memref<30x24xf32, #tpu.memory_space<vmem>>, vector<30x24xf32>
    %c16_i32_91 = arith.constant 16 : i32
    %105 = arith.addi %3, %c16_i32_91 : i32
    %c2_i32_92 = arith.constant 2 : i32
    %106 = arith.addi %105, %c2_i32_92 : i32
    %c0_93 = arith.constant 0 : index
    %107 = arith.index_cast %106 : i32 to index
    %c0_94 = arith.constant 0 : index
    %108 = vector.load %arg2[%c0_93, %107, %c0_94] : memref<1x64x32xf32, #tpu.memory_space<vmem>>, vector<1x30x32xf32>
    %109 = vector.shape_cast %108 : vector<1x30x32xf32> to vector<30x32xf32>
    %110 = arith.truncf %109 : vector<30x32xf32> to vector<30x32xbf16>
    %c8 = arith.constant 8 : index
    %c0_95 = arith.constant 0 : index
    %c0_96 = arith.constant 0 : index
    %111 = vector.load %arg3[%c8, %c0_95, %c0_96] : memref<9x32x24xbf16, #tpu.memory_space<vmem>>, vector<1x32x24xbf16>
    %112 = vector.shape_cast %111 : vector<1x32x24xbf16> to vector<32x24xbf16>
    %cst_97 = arith.constant dense<0.000000e+00> : vector<30x24xf32>
    %113 = tpu.matmul %110, %112, %cst_97 {dimension_numbers = #tpu.dot_dimension_numbers<[1], [0], [0], [1], [0, 0, 1, 1], [], []>} : vector<30x32xbf16>, vector<32x24xbf16>, vector<30x24xf32> -> vector<30x24xf32>
    %114 = arith.addf %104, %113 : vector<30x24xf32>
    %c0_98 = arith.constant 0 : index
    %c0_99 = arith.constant 0 : index
    %115 = vector.load %arg12[%c0_98, %c0_99] : memref<30x24xf32, #tpu.memory_space<vmem>>, vector<30x24xf32>
    tpu.vector_store %arg12[%c0_98, %c0_99], %114 {strides = array<i32>} : memref<30x24xf32, #tpu.memory_space<vmem>>, vector<30x24xf32>,
    %c0_100 = arith.constant 0 : index
    %c0_101 = arith.constant 0 : index
    %116 = vector.load %arg12[%c0_100, %c0_101] : memref<30x24xf32, #tpu.memory_space<vmem>>, vector<30x24xf32>
    %cst_102 = arith.constant 0.000000e+00 : f32
    %117 = vector.broadcast %cst_102 : f32 to vector<30x24xf32>
    %118 = arith.cmpf oge, %116, %117 : vector<30x24xf32>
    %119 = vector.broadcast %0 : f32 to vector<30x24xf32>
    %120 = arith.mulf %119, %116 : vector<30x24xf32>
    %121 = arith.select %118, %116, %120 : vector<30x24xi1>, vector<30x24xf32>
    %c0_103 = arith.constant 0 : index
    %c0_104 = arith.constant 0 : index
    %122 = vector.load %arg12[%c0_103, %c0_104] : memref<30x24xf32, #tpu.memory_space<vmem>>, vector<30x24xf32>
    tpu.vector_store %arg12[%c0_103, %c0_104], %121 {strides = array<i32>} : memref<30x24xf32, #tpu.memory_space<vmem>>, vector<30x24xf32>,
    %c0_105 = arith.constant 0 : index
    %c0_106 = arith.constant 0 : index
    %123 = vector.load %arg8[%c0_105, %c0_106] : memref<1x32xf32, #tpu.memory_space<vmem>>, vector<1x32xf32>
    %124 = vector.shape_cast %123 : vector<1x32xf32> to vector<1x32xf32>
    %125 = vector.broadcast %124 : vector<1x32xf32> to vector<12x32xf32>
    %c0_107 = arith.constant 0 : index
    %c0_108 = arith.constant 0 : index
    %126 = vector.load %arg13[%c0_107, %c0_108] : memref<12x32xf32, #tpu.memory_space<vmem>>, vector<12x32xf32>
    tpu.vector_store %arg13[%c0_107, %c0_108], %125 {strides = array<i32>} : memref<12x32xf32, #tpu.memory_space<vmem>>, vector<12x32xf32>,
    %c0_109 = arith.constant 0 : index
    %c0_110 = arith.constant 0 : index
    %127 = vector.load %arg13[%c0_109, %c0_110] : memref<12x32xf32, #tpu.memory_space<vmem>>, vector<12x32xf32>
    %c0_111 = arith.constant 0 : index
    %c0_112 = arith.constant 0 : index
    %128 = vector.load %arg12[%c0_111, %c0_112] : memref<30x24xf32, #tpu.memory_space<vmem>>, vector<12x24xf32>
    %129 = arith.truncf %128 : vector<12x24xf32> to vector<12x24xbf16>
    %c0_113 = arith.constant 0 : index
    %c0_114 = arith.constant 0 : index
    %c0_115 = arith.constant 0 : index
    %130 = vector.load %arg4[%c0_113, %c0_114, %c0_115] : memref<9x24x32xbf16, #tpu.memory_space<vmem>>, vector<1x24x32xbf16>
    %131 = vector.shape_cast %130 : vector<1x24x32xbf16> to vector<24x32xbf16>
    %cst_116 = arith.constant dense<0.000000e+00> : vector<12x32xf32>
    %132 = tpu.matmul %129, %131, %cst_116 {dimension_numbers = #tpu.dot_dimension_numbers<[1], [0], [0], [1], [0, 0, 1, 1], [], []>} : vector<12x24xbf16>, vector<24x32xbf16>, vector<12x32xf32> -> vector<12x32xf32>
    %133 = arith.addf %127, %132 : vector<12x32xf32>
    %c0_117 = arith.constant 0 : index
    %c0_118 = arith.constant 0 : index
    %134 = vector.load %arg13[%c0_117, %c0_118] : memref<12x32xf32, #tpu.memory_space<vmem>>, vector<12x32xf32>
    tpu.vector_store %arg13[%c0_117, %c0_118], %133 {strides = array<i32>} : memref<12x32xf32, #tpu.memory_space<vmem>>, vector<12x32xf32>,
    %c0_119 = arith.constant 0 : index
    %c0_120 = arith.constant 0 : index
    %135 = vector.load %arg13[%c0_119, %c0_120] : memref<12x32xf32, #tpu.memory_space<vmem>>, vector<12x32xf32>
    %c1_121 = arith.constant 1 : index
    %c0_122 = arith.constant 0 : index
    %136 = vector.load %arg12[%c1_121, %c0_122] : memref<30x24xf32, #tpu.memory_space<vmem>>, vector<12x24xf32>
    %137 = arith.truncf %136 : vector<12x24xf32> to vector<12x24xbf16>
    %c1_123 = arith.constant 1 : index
    %c0_124 = arith.constant 0 : index
    %c0_125 = arith.constant 0 : index
    %138 = vector.load %arg4[%c1_123, %c0_124, %c0_125] : memref<9x24x32xbf16, #tpu.memory_space<vmem>>, vector<1x24x32xbf16>
    %139 = vector.shape_cast %138 : vector<1x24x32xbf16> to vector<24x32xbf16>
    %cst_126 = arith.constant dense<0.000000e+00> : vector<12x32xf32>
    %140 = tpu.matmul %137, %139, %cst_126 {dimension_numbers = #tpu.dot_dimension_numbers<[1], [0], [0], [1], [0, 0, 1, 1], [], []>} : vector<12x24xbf16>, vector<24x32xbf16>, vector<12x32xf32> -> vector<12x32xf32>
    %141 = arith.addf %135, %140 : vector<12x32xf32>
    %c0_127 = arith.constant 0 : index
    %c0_128 = arith.constant 0 : index
    %142 = vector.load %arg13[%c0_127, %c0_128] : memref<12x32xf32, #tpu.memory_space<vmem>>, vector<12x32xf32>
    tpu.vector_store %arg13[%c0_127, %c0_128], %141 {strides = array<i32>} : memref<12x32xf32, #tpu.memory_space<vmem>>, vector<12x32xf32>,
    %c0_129 = arith.constant 0 : index
    %c0_130 = arith.constant 0 : index
    %143 = vector.load %arg13[%c0_129, %c0_130] : memref<12x32xf32, #tpu.memory_space<vmem>>, vector<12x32xf32>
    %c2_131 = arith.constant 2 : index
    %c0_132 = arith.constant 0 : index
    %144 = vector.load %arg12[%c2_131, %c0_132] : memref<30x24xf32, #tpu.memory_space<vmem>>, vector<12x24xf32>
    %145 = arith.truncf %144 : vector<12x24xf32> to vector<12x24xbf16>
    %c2_133 = arith.constant 2 : index
    %c0_134 = arith.constant 0 : index
    %c0_135 = arith.constant 0 : index
    %146 = vector.load %arg4[%c2_133, %c0_134, %c0_135] : memref<9x24x32xbf16, #tpu.memory_space<vmem>>, vector<1x24x32xbf16>
    %147 = vector.shape_cast %146 : vector<1x24x32xbf16> to vector<24x32xbf16>
    %cst_136 = arith.constant dense<0.000000e+00> : vector<12x32xf32>
    %148 = tpu.matmul %145, %147, %cst_136 {dimension_numbers = #tpu.dot_dimension_numbers<[1], [0], [0], [1], [0, 0, 1, 1], [], []>} : vector<12x24xbf16>, vector<24x32xbf16>, vector<12x32xf32> -> vector<12x32xf32>
    %149 = arith.addf %143, %148 : vector<12x32xf32>
    %c0_137 = arith.constant 0 : index
    %c0_138 = arith.constant 0 : index
    %150 = vector.load %arg13[%c0_137, %c0_138] : memref<12x32xf32, #tpu.memory_space<vmem>>, vector<12x32xf32>
    tpu.vector_store %arg13[%c0_137, %c0_138], %149 {strides = array<i32>} : memref<12x32xf32, #tpu.memory_space<vmem>>, vector<12x32xf32>,
    %c0_139 = arith.constant 0 : index
    %c0_140 = arith.constant 0 : index
    %151 = vector.load %arg13[%c0_139, %c0_140] : memref<12x32xf32, #tpu.memory_space<vmem>>, vector<12x32xf32>
    %c8_141 = arith.constant 8 : index
    %c0_142 = arith.constant 0 : index
    %152 = vector.load %arg12[%c8_141, %c0_142] : memref<30x24xf32, #tpu.memory_space<vmem>>, vector<12x24xf32>
    %153 = arith.truncf %152 : vector<12x24xf32> to vector<12x24xbf16>
    %c3_143 = arith.constant 3 : index
    %c0_144 = arith.constant 0 : index
    %c0_145 = arith.constant 0 : index
    %154 = vector.load %arg4[%c3_143, %c0_144, %c0_145] : memref<9x24x32xbf16, #tpu.memory_space<vmem>>, vector<1x24x32xbf16>
    %155 = vector.shape_cast %154 : vector<1x24x32xbf16> to vector<24x32xbf16>
    %cst_146 = arith.constant dense<0.000000e+00> : vector<12x32xf32>
    %156 = tpu.matmul %153, %155, %cst_146 {dimension_numbers = #tpu.dot_dimension_numbers<[1], [0], [0], [1], [0, 0, 1, 1], [], []>} : vector<12x24xbf16>, vector<24x32xbf16>, vector<12x32xf32> -> vector<12x32xf32>
    %157 = arith.addf %151, %156 : vector<12x32xf32>
    %c0_147 = arith.constant 0 : index
    %c0_148 = arith.constant 0 : index
    %158 = vector.load %arg13[%c0_147, %c0_148] : memref<12x32xf32, #tpu.memory_space<vmem>>, vector<12x32xf32>
    tpu.vector_store %arg13[%c0_147, %c0_148], %157 {strides = array<i32>} : memref<12x32xf32, #tpu.memory_space<vmem>>, vector<12x32xf32>,
    %c0_149 = arith.constant 0 : index
    %c0_150 = arith.constant 0 : index
    %159 = vector.load %arg13[%c0_149, %c0_150] : memref<12x32xf32, #tpu.memory_space<vmem>>, vector<12x32xf32>
    %c9 = arith.constant 9 : index
    %c0_151 = arith.constant 0 : index
    %160 = vector.load %arg12[%c9, %c0_151] : memref<30x24xf32, #tpu.memory_space<vmem>>, vector<12x24xf32>
    %161 = arith.truncf %160 : vector<12x24xf32> to vector<12x24xbf16>
    %c4_152 = arith.constant 4 : index
    %c0_153 = arith.constant 0 : index
    %c0_154 = arith.constant 0 : index
    %162 = vector.load %arg4[%c4_152, %c0_153, %c0_154] : memref<9x24x32xbf16, #tpu.memory_space<vmem>>, vector<1x24x32xbf16>
    %163 = vector.shape_cast %162 : vector<1x24x32xbf16> to vector<24x32xbf16>
    %cst_155 = arith.constant dense<0.000000e+00> : vector<12x32xf32>
    %164 = tpu.matmul %161, %163, %cst_155 {dimension_numbers = #tpu.dot_dimension_numbers<[1], [0], [0], [1], [0, 0, 1, 1], [], []>} : vector<12x24xbf16>, vector<24x32xbf16>, vector<12x32xf32> -> vector<12x32xf32>
    %165 = arith.addf %159, %164 : vector<12x32xf32>
    %c0_156 = arith.constant 0 : index
    %c0_157 = arith.constant 0 : index
    %166 = vector.load %arg13[%c0_156, %c0_157] : memref<12x32xf32, #tpu.memory_space<vmem>>, vector<12x32xf32>
    tpu.vector_store %arg13[%c0_156, %c0_157], %165 {strides = array<i32>} : memref<12x32xf32, #tpu.memory_space<vmem>>, vector<12x32xf32>,
    %c0_158 = arith.constant 0 : index
    %c0_159 = arith.constant 0 : index
    %167 = vector.load %arg13[%c0_158, %c0_159] : memref<12x32xf32, #tpu.memory_space<vmem>>, vector<12x32xf32>
    %c10 = arith.constant 10 : index
    %c0_160 = arith.constant 0 : index
    %168 = vector.load %arg12[%c10, %c0_160] : memref<30x24xf32, #tpu.memory_space<vmem>>, vector<12x24xf32>
    %169 = arith.truncf %168 : vector<12x24xf32> to vector<12x24xbf16>
    %c5_161 = arith.constant 5 : index
    %c0_162 = arith.constant 0 : index
    %c0_163 = arith.constant 0 : index
    %170 = vector.load %arg4[%c5_161, %c0_162, %c0_163] : memref<9x24x32xbf16, #tpu.memory_space<vmem>>, vector<1x24x32xbf16>
    %171 = vector.shape_cast %170 : vector<1x24x32xbf16> to vector<24x32xbf16>
    %cst_164 = arith.constant dense<0.000000e+00> : vector<12x32xf32>
    %172 = tpu.matmul %169, %171, %cst_164 {dimension_numbers = #tpu.dot_dimension_numbers<[1], [0], [0], [1], [0, 0, 1, 1], [], []>} : vector<12x24xbf16>, vector<24x32xbf16>, vector<12x32xf32> -> vector<12x32xf32>
    %173 = arith.addf %167, %172 : vector<12x32xf32>
    %c0_165 = arith.constant 0 : index
    %c0_166 = arith.constant 0 : index
    %174 = vector.load %arg13[%c0_165, %c0_166] : memref<12x32xf32, #tpu.memory_space<vmem>>, vector<12x32xf32>
    tpu.vector_store %arg13[%c0_165, %c0_166], %173 {strides = array<i32>} : memref<12x32xf32, #tpu.memory_space<vmem>>, vector<12x32xf32>,
    %c0_167 = arith.constant 0 : index
    %c0_168 = arith.constant 0 : index
    %175 = vector.load %arg13[%c0_167, %c0_168] : memref<12x32xf32, #tpu.memory_space<vmem>>, vector<12x32xf32>
    %c16 = arith.constant 16 : index
    %c0_169 = arith.constant 0 : index
    %176 = vector.load %arg12[%c16, %c0_169] : memref<30x24xf32, #tpu.memory_space<vmem>>, vector<12x24xf32>
    %177 = arith.truncf %176 : vector<12x24xf32> to vector<12x24xbf16>
    %c6_170 = arith.constant 6 : index
    %c0_171 = arith.constant 0 : index
    %c0_172 = arith.constant 0 : index
    %178 = vector.load %arg4[%c6_170, %c0_171, %c0_172] : memref<9x24x32xbf16, #tpu.memory_space<vmem>>, vector<1x24x32xbf16>
    %179 = vector.shape_cast %178 : vector<1x24x32xbf16> to vector<24x32xbf16>
    %cst_173 = arith.constant dense<0.000000e+00> : vector<12x32xf32>
    %180 = tpu.matmul %177, %179, %cst_173 {dimension_numbers = #tpu.dot_dimension_numbers<[1], [0], [0], [1], [0, 0, 1, 1], [], []>} : vector<12x24xbf16>, vector<24x32xbf16>, vector<12x32xf32> -> vector<12x32xf32>
    %181 = arith.addf %175, %180 : vector<12x32xf32>
    %c0_174 = arith.constant 0 : index
    %c0_175 = arith.constant 0 : index
    %182 = vector.load %arg13[%c0_174, %c0_175] : memref<12x32xf32, #tpu.memory_space<vmem>>, vector<12x32xf32>
    tpu.vector_store %arg13[%c0_174, %c0_175], %181 {strides = array<i32>} : memref<12x32xf32, #tpu.memory_space<vmem>>, vector<12x32xf32>,
    %c0_176 = arith.constant 0 : index
    %c0_177 = arith.constant 0 : index
    %183 = vector.load %arg13[%c0_176, %c0_177] : memref<12x32xf32, #tpu.memory_space<vmem>>, vector<12x32xf32>
    %c17 = arith.constant 17 : index
    %c0_178 = arith.constant 0 : index
    %184 = vector.load %arg12[%c17, %c0_178] : memref<30x24xf32, #tpu.memory_space<vmem>>, vector<12x24xf32>
    %185 = arith.truncf %184 : vector<12x24xf32> to vector<12x24xbf16>
    %c7_179 = arith.constant 7 : index
    %c0_180 = arith.constant 0 : index
    %c0_181 = arith.constant 0 : index
    %186 = vector.load %arg4[%c7_179, %c0_180, %c0_181] : memref<9x24x32xbf16, #tpu.memory_space<vmem>>, vector<1x24x32xbf16>
    %187 = vector.shape_cast %186 : vector<1x24x32xbf16> to vector<24x32xbf16>
    %cst_182 = arith.constant dense<0.000000e+00> : vector<12x32xf32>
    %188 = tpu.matmul %185, %187, %cst_182 {dimension_numbers = #tpu.dot_dimension_numbers<[1], [0], [0], [1], [0, 0, 1, 1], [], []>} : vector<12x24xbf16>, vector<24x32xbf16>, vector<12x32xf32> -> vector<12x32xf32>
    %189 = arith.addf %183, %188 : vector<12x32xf32>
    %c0_183 = arith.constant 0 : index
    %c0_184 = arith.constant 0 : index
    %190 = vector.load %arg13[%c0_183, %c0_184] : memref<12x32xf32, #tpu.memory_space<vmem>>, vector<12x32xf32>
    tpu.vector_store %arg13[%c0_183, %c0_184], %189 {strides = array<i32>} : memref<12x32xf32, #tpu.memory_space<vmem>>, vector<12x32xf32>,
    %c0_185 = arith.constant 0 : index
    %c0_186 = arith.constant 0 : index
    %191 = vector.load %arg13[%c0_185, %c0_186] : memref<12x32xf32, #tpu.memory_space<vmem>>, vector<12x32xf32>
    %c18 = arith.constant 18 : index
    %c0_187 = arith.constant 0 : index
    %192 = vector.load %arg12[%c18, %c0_187] : memref<30x24xf32, #tpu.memory_space<vmem>>, vector<12x24xf32>
    %193 = arith.truncf %192 : vector<12x24xf32> to vector<12x24xbf16>
    %c8_188 = arith.constant 8 : index
    %c0_189 = arith.constant 0 : index
    %c0_190 = arith.constant 0 : index
    %194 = vector.load %arg4[%c8_188, %c0_189, %c0_190] : memref<9x24x32xbf16, #tpu.memory_space<vmem>>, vector<1x24x32xbf16>
    %195 = vector.shape_cast %194 : vector<1x24x32xbf16> to vector<24x32xbf16>
    %cst_191 = arith.constant dense<0.000000e+00> : vector<12x32xf32>
    %196 = tpu.matmul %193, %195, %cst_191 {dimension_numbers = #tpu.dot_dimension_numbers<[1], [0], [0], [1], [0, 0, 1, 1], [], []>} : vector<12x24xbf16>, vector<24x32xbf16>, vector<12x32xf32> -> vector<12x32xf32>
    %197 = arith.addf %191, %196 : vector<12x32xf32>
    %c0_192 = arith.constant 0 : index
    %c0_193 = arith.constant 0 : index
    %198 = vector.load %arg13[%c0_192, %c0_193] : memref<12x32xf32, #tpu.memory_space<vmem>>, vector<12x32xf32>
    tpu.vector_store %arg13[%c0_192, %c0_193], %197 {strides = array<i32>} : memref<12x32xf32, #tpu.memory_space<vmem>>, vector<12x32xf32>,
    %c0_194 = arith.constant 0 : index
    %c0_195 = arith.constant 0 : index
    %199 = vector.load %arg13[%c0_194, %c0_195] : memref<12x32xf32, #tpu.memory_space<vmem>>, vector<12x32xf32>
    %cst_196 = arith.constant 0.000000e+00 : f32
    %200 = vector.broadcast %cst_196 : f32 to vector<12x32xf32>
    %201 = arith.cmpf oge, %199, %200 : vector<12x32xf32>
    %202 = vector.broadcast %1 : f32 to vector<12x32xf32>
    %203 = arith.mulf %202, %199 : vector<12x32xf32>
    %204 = arith.select %201, %199, %203 : vector<12x32xi1>, vector<12x32xf32>
    %205 = arith.truncf %204 : vector<12x32xf32> to vector<12x32xbf16>
    %c0_197 = arith.constant 0 : index
    %c0_198 = arith.constant 0 : index
    %206 = vector.load %arg6[%c0_197, %c0_198] : memref<32x16xbf16, #tpu.memory_space<vmem>>, vector<32x16xbf16>
    %cst_199 = arith.constant dense<0.000000e+00> : vector<12x16xf32>
    %207 = tpu.matmul %205, %206, %cst_199 {dimension_numbers = #tpu.dot_dimension_numbers<[1], [0], [0], [1], [0, 0, 1, 1], [], []>} : vector<12x32xbf16>, vector<32x16xbf16>, vector<12x16xf32> -> vector<12x16xf32>
    %c16_i32_200 = arith.constant 16 : i32
    %208 = arith.addi %3, %c16_i32_200 : i32
    %c2_i32_201 = arith.constant 2 : i32
    %209 = arith.addi %208, %c2_i32_201 : i32
    %c0_202 = arith.constant 0 : index
    %210 = arith.index_cast %209 : i32 to index
    %c0_203 = arith.constant 0 : index
    %211 = vector.load %arg2[%c0_202, %210, %c0_203] : memref<1x64x32xf32, #tpu.memory_space<vmem>>, vector<1x12x32xf32>
    %212 = vector.shape_cast %211 : vector<1x12x32xf32> to vector<12x32xf32>
    %213 = arith.truncf %212 : vector<12x32xf32> to vector<12x32xbf16>
    %c0_204 = arith.constant 0 : index
    %c0_205 = arith.constant 0 : index
    %214 = vector.load %arg5[%c0_204, %c0_205] : memref<32x16xbf16, #tpu.memory_space<vmem>>, vector<32x16xbf16>
    %cst_206 = arith.constant dense<0.000000e+00> : vector<12x16xf32>
    %215 = tpu.matmul %213, %214, %cst_206 {dimension_numbers = #tpu.dot_dimension_numbers<[1], [0], [0], [1], [0, 0, 1, 1], [], []>} : vector<12x32xbf16>, vector<32x16xbf16>, vector<12x16xf32> -> vector<12x16xf32>
    %216 = arith.addf %207, %215 : vector<12x16xf32>
    %c0_207 = arith.constant 0 : index
    %c0_208 = arith.constant 0 : index
    %217 = vector.load %arg9[%c0_207, %c0_208] : memref<1x16xf32, #tpu.memory_space<vmem>>, vector<1x16xf32>
    %218 = vector.broadcast %217 : vector<1x16xf32> to vector<12x16xf32>
    %219 = arith.addf %216, %218 : vector<12x16xf32>
    %c0_209 = arith.constant 0 : index
    %c0_210 = arith.constant 0 : index
    %220 = vector.load %arg14[%c0_209, %c0_210] : memref<12x16xf32, #tpu.memory_space<vmem>>, vector<12x16xf32>
    tpu.vector_store %arg14[%c0_209, %c0_210], %219 {strides = array<i32>} : memref<12x16xf32, #tpu.memory_space<vmem>>, vector<12x16xf32>,
    %c0_211 = arith.constant 0 : index
    %c0_212 = arith.constant 0 : index
    %221 = tpu.strided_load %arg14[%c0_211, %c0_212] {strides = array<i32: 2, 1>} : memref<12x16xf32, #tpu.memory_space<vmem>>, vector<2x16xf32>
    %c1_213 = arith.constant 1 : index
    %c0_214 = arith.constant 0 : index
    %222 = tpu.strided_load %arg14[%c1_213, %c0_214] {strides = array<i32: 2, 1>} : memref<12x16xf32, #tpu.memory_space<vmem>>, vector<2x16xf32>
    %223 = arith.addf %221, %222 : vector<2x16xf32>
    %c8_215 = arith.constant 8 : index
    %c0_216 = arith.constant 0 : index
    %224 = tpu.strided_load %arg14[%c8_215, %c0_216] {strides = array<i32: 2, 1>} : memref<12x16xf32, #tpu.memory_space<vmem>>, vector<2x16xf32>
    %225 = arith.addf %223, %224 : vector<2x16xf32>
    %c9_217 = arith.constant 9 : index
    %c0_218 = arith.constant 0 : index
    %226 = tpu.strided_load %arg14[%c9_217, %c0_218] {strides = array<i32: 2, 1>} : memref<12x16xf32, #tpu.memory_space<vmem>>, vector<2x16xf32>
    %227 = arith.addf %225, %226 : vector<2x16xf32>
    %c0_219 = arith.constant 0 : index
    %c0_220 = arith.constant 0 : index
    %c0_221 = arith.constant 0 : index
    %c0_222 = arith.constant 0 : index
    %228 = vector.load %arg11[%c0_219, %c0_220, %c0_221, %c0_222] : memref<1x1x2x16xf32, #tpu.memory_space<vmem>>, vector<1x1x2x16xf32>
    %229 = vector.shape_cast %228 : vector<1x1x2x16xf32> to vector<2x16xf32>
    %230 = vector.shape_cast %227 : vector<2x16xf32> to vector<1x1x2x16xf32>
    tpu.vector_store %arg11[%c0_219, %c0_220, %c0_221, %c0_222], %230 {strides = array<i32>} : memref<1x1x2x16xf32, #tpu.memory_space<vmem>>, vector<1x1x2x16xf32>,
    return
  }
  func.func @transform_0(%arg0: i32, %arg1: i32) -> (i32, i32, i32) {
    %c0_i32 = arith.constant 0 : i32
    %c0_i32_0 = arith.constant 0 : i32
    %c0_i32_1 = arith.constant 0 : i32
    return %arg0, %c0_i32, %c0_i32_0 : i32, i32, i32
  }
  func.func @transform_1(%arg0: i32, %arg1: i32) -> (i32, i32, i32) {
    %c0_i32 = arith.constant 0 : i32
    %c0_i32_0 = arith.constant 0 : i32
    %c0_i32_1 = arith.constant 0 : i32
    %c0_i32_2 = arith.constant 0 : i32
    return %c0_i32, %c0_i32_0, %c0_i32_1 : i32, i32, i32
  }
  func.func @transform_2(%arg0: i32, %arg1: i32) -> (i32, i32, i32) {
    %c0_i32 = arith.constant 0 : i32
    %c0_i32_0 = arith.constant 0 : i32
    %c0_i32_1 = arith.constant 0 : i32
    %c0_i32_2 = arith.constant 0 : i32
    return %c0_i32, %c0_i32_0, %c0_i32_1 : i32, i32, i32
  }
  func.func @transform_3(%arg0: i32, %arg1: i32) -> (i32, i32) {
    %c0_i32 = arith.constant 0 : i32
    %c0_i32_0 = arith.constant 0 : i32
    %c0_i32_1 = arith.constant 0 : i32
    return %c0_i32, %c0_i32_0 : i32, i32
  }
  func.func @transform_4(%arg0: i32, %arg1: i32) -> (i32, i32) {
    %c0_i32 = arith.constant 0 : i32
    %c0_i32_0 = arith.constant 0 : i32
    %c0_i32_1 = arith.constant 0 : i32
    return %c0_i32, %c0_i32_0 : i32, i32
  }
  func.func @transform_5(%arg0: i32, %arg1: i32) -> (i32, i32) {
    %c0_i32 = arith.constant 0 : i32
    %c0_i32_0 = arith.constant 0 : i32
    %c0_i32_1 = arith.constant 0 : i32
    return %c0_i32, %c0_i32_0 : i32, i32
  }
  func.func @transform_6(%arg0: i32, %arg1: i32) -> (i32, i32) {
    %c0_i32 = arith.constant 0 : i32
    %c0_i32_0 = arith.constant 0 : i32
    %c0_i32_1 = arith.constant 0 : i32
    return %c0_i32, %c0_i32_0 : i32, i32
  }
  func.func @transform_7(%arg0: i32, %arg1: i32) -> (i32, i32) {
    %c0_i32 = arith.constant 0 : i32
    %c0_i32_0 = arith.constant 0 : i32
    %c0_i32_1 = arith.constant 0 : i32
    return %c0_i32, %c0_i32_0 : i32, i32
  }
  func.func @transform_8(%arg0: i32, %arg1: i32) -> i32 {
    %c0_i32 = arith.constant 0 : i32
    %c0_i32_0 = arith.constant 0 : i32
    return %c0_i32 : i32
  }
  func.func @transform_9(%arg0: i32, %arg1: i32) -> (i32, i32, i32, i32) {
    %c0_i32 = arith.constant 0 : i32
    %c0_i32_0 = arith.constant 0 : i32
    %c0_i32_1 = arith.constant 0 : i32
    return %arg0, %arg1, %c0_i32, %c0_i32_0 : i32, i32, i32, i32
  }
}

</mosaic_0001>

<llo_original>
// kernel: mul.416
$region0: #{mul.416}
  %s0 = inlined_call_operand.vmem [shape: f32[2,2,2], index: 0, kind: input, shape index: {}]
  %s1 = inlined_call_operand.vmem [shape: f32[4,2], index: 1, kind: output, shape index: {}]
  $region1: #{mul.416} parent=0
    #allocation0 [shape = 'u8[4096]{0}', space=vmem, size = 0x1000, scoped, tag = 'scoped mem for output reshape']
    #allocation1 [shape = 'u8[8192]{0}', space=vmem, size = 0x2000, scoped, tag = 'scoped mem for input reshape']
    %s3 = ssub.s32 4, 1
    %s4 = scalar_lea.vmem %s0, 2
    %v5 = vld [vmem:[%s4] sm:%s3]
    %s6 = scalar_lea.vmem [#allocation1], 8
    %7 = vst [vmem:[%s6] sm:%s3] %v5
    %v8 = vld [vmem:[%s0] sm:%s3]
    %9 = vst [vmem:[#allocation1] sm:%s3] %v8
    %s10 = smov 3
    %v11 = vld [vmem:[#allocation1] ss:$8 sm:%s10]
    %vm12 = vcmask 15360
    %13 = vst.msk [vmem:[#allocation0] sm:$0x3] %vm12, %v11
    %s14 = scalar_lea.vmem [#allocation1], 1
    %s15 = smov 3
    %v16 = vld [vmem:[%s14] ss:$8 sm:%s15]
    %17 = vrot.lane.b32.xlu0 %v16, 2
    %v18 = vpop.permute.xlu0 %17
    %vm19 = vcmask 31760
    %20 = vst.msk [vmem:[#allocation0] sm:$0x3] %vm19, %v18
    %s22 = ssub.s32 4, 1
    %v23 = vld [vmem:[#allocation0] sm:%s22]
    %s25 = ssub.s32 4, 1
    %26 = vst [vmem:[%s1] sm:%s25] %v23

// kernel: tile.18
$region0: #{tile.18}
  #allocation0 [shape = 's32[1]{0}', space=sflag, size = 0x4, scoped, tag = 'scoped memory for tile.18']
  %s0 = inlined_call_operand.vmem [shape: f32[4], index: 0, kind: input, shape index: {}]
  %s1 = inlined_call_operand.vmem [shape: f32[6,4], index: 1, kind: output, shape index: {}]
  // Predicated region
  $region2: #{tile.18} parent=0 // pred_check
    _
  $region3: #{tile.18} parent=0 // pred_check_branch
    %3 = sbr.rel (0) target = $region5
  $region4: #{tile.18} parent=0 // pred_region
    _
  $region5: #{tile.18} parent=0 // pred_fallthru
    _
  %v4 = vld [vmem:[%s0] ss:$0 sm:$0xff]
  %5 = vst [vmem:[%s1] sm:$0xff] %v4

// kernel: tile.19
$region0: #{tile.19}
  %s0 = inlined_call_operand.vmem [shape: f32[6,4], index: 0, kind: input, shape index: {}]
  %s1 = inlined_call_operand.vmem [shape: f32[1,24], index: 1, kind: output, shape index: {}]
  $region1: #{tile.19} parent=0
    #allocation0 [shape = 'u8[4096]{0}', space=vmem, size = 0x1000, scoped, tag = 'scoped mem for output reshape']
    %v2 = vld [vmem:[%s0] sm:$0x1]
    %vm3 = vcmask 31744
    %4 = vst.msk [vmem:[#allocation0] sm:$0x1] %vm3, %v2
    %s5 = scalar_lea.vmem %s0, 5
    %v6 = vld [vmem:[%s5] sm:$0x1]
    %7 = vrot.lane.b32.xlu0 %v6, 20
    %v8 = vpop.permute.xlu0 %7
    %vm9 = vcmask 195744
    %10 = vst.msk [vmem:[#allocation0] sm:$0x1] %vm9, %v8
    %s11 = scalar_lea.vmem %s0, 4
    %v12 = vld [vmem:[%s11] sm:$0x1]
    %13 = vrot.lane.b32.xlu0 %v12, 16
    %v14 = vpop.permute.xlu0 %13
    %vm15 = vcmask 162944
    %16 = vst.msk [vmem:[#allocation0] sm:$0x1] %vm15, %v14
    %s17 = scalar_lea.vmem %s0, 3
    %v18 = vld [vmem:[%s17] sm:$0x1]
    %19 = vrot.lane.b32.xlu0 %v18, 12
    %v20 = vpop.permute.xlu0 %19
    %vm21 = vcmask 130144
    %22 = vst.msk [vmem:[#allocation0] sm:$0x1] %vm21, %v20
    %s23 = scalar_lea.vmem %s0, 2
    %v24 = vld [vmem:[%s23] sm:$0x1]
    %25 = vrot.lane.b32.xlu0 %v24, 8
    %v26 = vpop.permute.xlu0 %25
    %vm27 = vcmask 97344
    %28 = vst.msk [vmem:[#allocation0] sm:$0x1] %vm27, %v26
    %s29 = scalar_lea.vmem %s0, 1
    %v30 = vld [vmem:[%s29] sm:$0x1]
    %31 = vrot.lane.b32.xlu0 %v30, 4
    %v32 = vpop.permute.xlu0 %31
    %vm33 = vcmask 64544
    %34 = vst.msk [vmem:[#allocation0] sm:$0x1] %vm33, %v32
    %s36 = ssub.s32 2, 1
    %v37 = vld [vmem:[#allocation0] sm:%s36]
    %s39 = ssub.s32 2, 1
    %40 = vst [vmem:[%s1] sm:%s39] %v37

// kernel: tile.23
$region0: #{tile.23}
  #allocation0 [shape = 's32[1]{0}', space=sflag, size = 0x4, scoped, tag = 'scoped memory for tile.23']
  %s0 = inlined_call_operand.vmem [shape: f32[8], index: 0, kind: input, shape index: {}]
  %s1 = inlined_call_operand.vmem [shape: f32[4,8], index: 1, kind: output, shape index: {}]
  // Predicated region
  $region2: #{tile.23} parent=0 // pred_check
    _
  $region3: #{tile.23} parent=0 // pred_check_branch
    %3 = sbr.rel (0) target = $region5
  $region4: #{tile.23} parent=0 // pred_region
    _
  $region5: #{tile.23} parent=0 // pred_fallthru
    _
  %v4 = vld [vmem:[%s0] ss:$0 sm:$0xff]
  %5 = vst [vmem:[%s1] sm:$0xf] %v4

// kernel: tile.24
$region0: #{tile.24}
  %s0 = inlined_call_operand.vmem [shape: f32[4,8], index: 0, kind: input, shape index: {}]
  %s1 = inlined_call_operand.vmem [shape: f32[1,32], index: 1, kind: output, shape index: {}]
  $region1: #{tile.24} parent=0
    #allocation0 [shape = 'u8[4096]{0}', space=vmem, size = 0x1000, scoped, tag = 'scoped mem for output reshape']
    #allocation1 [shape = 'u8[4096]{0}', space=vmem, size = 0x1000, scoped, tag = 'scoped mem for input reshape']
    %s3 = ssub.s32 16, 1
    %v4 = vld [vmem:[%s0] sm:%s3]
    %5 = vst [vmem:[#allocation1] sm:%s3] %v4
    %v6 = vld [vmem:[#allocation1] sm:$0x1]
    %vm7 = vcmask 64512
    %8 = vst.msk [vmem:[#allocation0] sm:$0x1] %vm7, %v6
    %s9 = scalar_lea.vmem [#allocation1], 3
    %v10 = vld [vmem:[%s9] sm:$0x1]
    %11 = vrot.lane.b32.xlu0 %v10, 24
    %v12 = vpop.permute.xlu0 %11
    %vm13 = vcmask 261312
    %14 = vst.msk [vmem:[#allocation0] sm:$0x1] %vm13, %v12
    %s15 = scalar_lea.vmem [#allocation1], 2
    %v16 = vld [vmem:[%s15] sm:$0x1]
    %17 = vrot.lane.b32.xlu0 %v16, 16
    %v18 = vpop.permute.xlu0 %17
    %vm19 = vcmask 195712
    %20 = vst.msk [vmem:[#allocation0] sm:$0x1] %vm19, %v18
    %s21 = scalar_lea.vmem [#allocation1], 1
    %v22 = vld [vmem:[%s21] sm:$0x1]
    %23 = vrot.lane.b32.xlu0 %v22, 8
    %v24 = vpop.permute.xlu0 %23
    %vm25 = vcmask 130112
    %26 = vst.msk [vmem:[#allocation0] sm:$0x1] %vm25, %v24
    %s28 = ssub.s32 2, 1
    %v29 = vld [vmem:[#allocation0] sm:%s28]
    %s31 = ssub.s32 2, 1
    %32 = vst [vmem:[%s1] sm:%s31] %v29

// kernel: residual_block_forward.1
$region0: #{residual_block_forward.1}
  #allocation0 [shape = 'u32[]', space=smem, size = 0x4, offset = 0x4, fixed_abs, tag = 'smem constant byte address 0x4 - core index']
  #allocation1 [shape = 'u32[72,128]{1,0:T(1,128)}', space=vmem, size = 0x9000, scoped, tag = 'internal scratch']
  #allocation2 [shape = 'f32[30,24]{1,0:T(8,128)}', space=vmem, size = 0x4000, scoped, tag = 'scratch operand']
  #allocation3 [shape = 'f32[12,32]{1,0:T(8,128)}', space=vmem, size = 0x2000, scoped, tag = 'scratch operand']
  #allocation4 [shape = 'f32[12,16]{1,0:T(8,128)}', space=vmem, size = 0x2000, scoped, tag = 'scratch operand']
  %s0 = inlined_call_operand.vmem [shape: f32[2,64,32], index: 0, kind: input, shape index: {}]
  %s1 = inlined_call_operand.vmem [shape: bf16[9,32,24], index: 1, kind: input, shape index: {}]
  %s2 = inlined_call_operand.vmem [shape: bf16[9,24,32], index: 2, kind: input, shape index: {}]
  %s3 = inlined_call_operand.vmem [shape: bf16[32,16], index: 3, kind: input, shape index: {}]
  %s4 = inlined_call_operand.vmem [shape: bf16[32,16], index: 4, kind: input, shape index: {}]
  %s5 = inlined_call_operand.vmem [shape: f32[1,24], index: 5, kind: input, shape index: {}]
  %s6 = inlined_call_operand.vmem [shape: f32[1,32], index: 6, kind: input, shape index: {}]
  %s7 = inlined_call_operand.vmem [shape: f32[1,16], index: 7, kind: input, shape index: {}]
  %s8 = inlined_call_operand.vmem [shape: f32[2], index: 8, kind: input, shape index: {}]
  %s9 = inlined_call_operand.vmem [shape: f32[2,2,2,16], index: 9, kind: output, shape index: {}]
  %s10 = sld [smem:[#allocation0]]
  $region73: #{residual_block_forward.1} parent=0
    _
  %s12 = ssub.s32 1, %s10
  %s13 = scalar_select 0, %s12, %s10
  $region1: #{residual_block_forward.1} parent=0
    #allocation5 [shape = 'u8[512]{0}', space=smem, size = 0x200, scoped, tag = 'input window, operand 8, single buffered']
    #allocation6 [shape = 's32[2]{0}', space=sflag, size = 0x8, scoped, tag = 'scoped memory for residual_block_forward.1']
    %14 = vsyncpa [#allocation6], 0
    loop: start=0, step=1, limit=6
    $region2: #{residual_block_forward.1} parent=1 // loop_pre_header
      _
    $region3: #{residual_block_forward.1} parent=1 // loop_header
      %s16 = sphi 0, %s20
      %p17 = scmp.ge.s32.totalorder %s16, 6
      %s23 = sphi 0, %s35
      %s24 = sphi 0, %s31
      %s25 = sphi 0, %s23
      %s26 = sphi 0, %s24
      %s27 = sphi 0, %s25
      %s28 = sphi 0, %s26
      %s38 = sphi 0, %s40
      %s41 = sphi 0, %s38
      %s42 = sphi 0, %s41
      %s58 = sphi 0, %s42
      %s62 = sphi 0, %s62
      %s64 = sphi 0, %s62
      %s65 = sphi 0, %s64
      %s79 = sphi 0, %s65
      %s83 = sphi 0, %s83
      %s85 = sphi 0, %s83
      %s86 = sphi 0, %s85
      %s100 = sphi 0, %s86
      %s104 = sphi 0, %s104
      %s106 = sphi 0, %s104
      %s107 = sphi 0, %s106
      %s121 = sphi 0, %s107
      %s125 = sphi 0, %s125
      %s127 = sphi 0, %s125
      %s128 = sphi 0, %s127
      %s142 = sphi 0, %s128
      %s146 = sphi 0, %s146
      %s148 = sphi 0, %s146
      %s149 = sphi 0, %s148
      %s163 = sphi 0, %s149
      %s167 = sphi 0, %s167
      %s169 = sphi 0, %s167
      %s170 = sphi 0, %s169
      %s184 = sphi 0, %s170
      %s188 = sphi 0, %s188
      %s190 = sphi 0, %s188
      %s191 = sphi 0, %s190
      %s205 = sphi 0, %s191
      %s209 = sphi 0, %s209
      %s211 = sphi 0, %s209
      %s212 = sphi 0, %s211
      %s226 = sphi 0, %s212
      %s234 = sphi 0, %s236
      %s237 = sphi 0, %s234
      %s238 = sphi 0, %s237
      %s254 = sphi 0, %s238
    $region4: #{residual_block_forward.1} parent=1 // loop_header_branch
      %19 = sbr.rel (%p17) target = $region8
    $region5: #{residual_block_forward.1} parent=1 // loop_body
      %s21 = ssub.s32 %s16, 1
      %s22 = ssub.s32 %s16, 2
      %s29 = sadd.s32 1, %s24
      %p30 = scmp.ge.s32.totalorder %s29, 2
      %s31 = scalar_select %p30, 0, %s29
      %s32 = sadd.s32 1, %s23
      %s33 = scalar_select %p30, %s32, %s23
      %p34 = scmp.ge.s32.totalorder %s33, 2
      %s35 = scalar_select %p34, 0, %s33
      %s36 = ssub.s32 %s23, %s35
      %p37 = scmp.eq.s32.totalorder %s36, 0
      %s39 = sadd.s32 %s38, 1
      %s40 = scalar_select %p37, %s38, %s39
      %p43 = pneg %p37
      %p44 = scmp.eq.s32.totalorder %s16, 3
      %p45 = por %p43, %p44
      %p46 = scmp.ne.s32.totalorder %s38, %s41
      %p47 = scmp.eq.s32.totalorder %s16, 0
      %p48 = por %p46, %p47
      %p49 = scmp.ne.s32.totalorder %s38, %s41
      %p50 = scmp.eq.s32.totalorder %s21, 3
      %p51 = por %p49, %p50
      %p52 = scmp.ne.s32.totalorder %s41, %s42
      %p53 = scmp.eq.s32.totalorder %s21, 0
      %p54 = por %p52, %p53
      %p55 = scmp.ne.s32.totalorder %s41, %s42
      %p56 = scmp.eq.s32.totalorder %s22, 3
      %p57 = por %p55, %p56
      %p59 = scmp.ne.s32.totalorder %s42, %s58
      %p60 = scmp.eq.s32.totalorder %s22, 0
      %p61 = por %p59, %p60
      %s63 = sadd.s32 %s62, 1
      %p66 = scmp.eq.s32.totalorder %s16, 3
      %p67 = scmp.ne.s32.totalorder %s62, %s64
      %p68 = scmp.eq.s32.totalorder %s16, 0
      %p69 = por %p67, %p68
      %p70 = scmp.ne.s32.totalorder %s62, %s64
      %p71 = scmp.eq.s32.totalorder %s21, 3
      %p72 = por %p70, %p71
      %p73 = scmp.ne.s32.totalorder %s64, %s65
      %p74 = scmp.eq.s32.totalorder %s21, 0
      %p75 = por %p73, %p74
      %p76 = scmp.ne.s32.totalorder %s64, %s65
      %p77 = scmp.eq.s32.totalorder %s22, 3
      %p78 = por %p76, %p77
      %p80 = scmp.ne.s32.totalorder %s65, %s79
      %p81 = scmp.eq.s32.totalorder %s22, 0
      %p82 = por %p80, %p81
      %s84 = sadd.s32 %s83, 1
      %p87 = scmp.eq.s32.totalorder %s16, 3
      %p88 = scmp.ne.s32.totalorder %s83, %s85
      %p89 = scmp.eq.s32.totalorder %s16, 0
      %p90 = por %p88, %p89
      %p91 = scmp.ne.s32.totalorder %s83, %s85
      %p92 = scmp.eq.s32.totalorder %s21, 3
      %p93 = por %p91, %p92
      %p94 = scmp.ne.s32.totalorder %s85, %s86
      %p95 = scmp.eq.s32.totalorder %s21, 0
      %p96 = por %p94, %p95
      %p97 = scmp.ne.s32.totalorder %s85, %s86
      %p98 = scmp.eq.s32.totalorder %s22, 3
      %p99 = por %p97, %p98
      %p101 = scmp.ne.s32.totalorder %s86, %s100
      %p102 = scmp.eq.s32.totalorder %s22, 0
      %p103 = por %p101, %p102
      %s105 = sadd.s32 %s104, 1
      %p108 = scmp.eq.s32.totalorder %s16, 3
      %p109 = scmp.ne.s32.totalorder %s104, %s106
      %p110 = scmp.eq.s32.totalorder %s16, 0
      %p111 = por %p109, %p110
      %p112 = scmp.ne.s32.totalorder %s104, %s106
      %p113 = scmp.eq.s32.totalorder %s21, 3
      %p114 = por %p112, %p113
      %p115 = scmp.ne.s32.totalorder %s106, %s107
      %p116 = scmp.eq.s32.totalorder %s21, 0
      %p117 = por %p115, %p116
      %p118 = scmp.ne.s32.totalorder %s106, %s107
      %p119 = scmp.eq.s32.totalorder %s22, 3
      %p120 = por %p118, %p119
      %p122 = scmp.ne.s32.totalorder %s107, %s121
      %p123 = scmp.eq.s32.totalorder %s22, 0
      %p124 = por %p122, %p123
      %s126 = sadd.s32 %s125, 1
      %p129 = scmp.eq.s32.totalorder %s16, 3
      %p130 = scmp.ne.s32.totalorder %s125, %s127
      %p131 = scmp.eq.s32.totalorder %s16, 0
      %p132 = por %p130, %p131
      %p133 = scmp.ne.s32.totalorder %s125, %s127
      %p134 = scmp.eq.s32.totalorder %s21, 3
      %p135 = por %p133, %p134
      %p136 = scmp.ne.s32.totalorder %s127, %s128
      %p137 = scmp.eq.s32.totalorder %s21, 0
      %p138 = por %p136, %p137
      %p139 = scmp.ne.s32.totalorder %s127, %s128
      %p140 = scmp.eq.s32.totalorder %s22, 3
      %p141 = por %p139, %p140
      %p143 = scmp.ne.s32.totalorder %s128, %s142
      %p144 = scmp.eq.s32.totalorder %s22, 0
      %p145 = por %p143, %p144
      %s147 = sadd.s32 %s146, 1
      %p150 = scmp.eq.s32.totalorder %s16, 3
      %p151 = scmp.ne.s32.totalorder %s146, %s148
      %p152 = scmp.eq.s32.totalorder %s16, 0
      %p153 = por %p151, %p152
      %p154 = scmp.ne.s32.totalorder %s146, %s148
      %p155 = scmp.eq.s32.totalorder %s21, 3
      %p156 = por %p154, %p155
      %p157 = scmp.ne.s32.totalorder %s148, %s149
      %p158 = scmp.eq.s32.totalorder %s21, 0
      %p159 = por %p157, %p158
      %p160 = scmp.ne.s32.totalorder %s148, %s149
      %p161 = scmp.eq.s32.totalorder %s22, 3
      %p162 = por %p160, %p161
      %p164 = scmp.ne.s32.totalorder %s149, %s163
      %p165 = scmp.eq.s32.totalorder %s22, 0
      %p166 = por %p164, %p165
      %s168 = sadd.s32 %s167, 1
      %p171 = scmp.eq.s32.totalorder %s16, 3
      %p172 = scmp.ne.s32.totalorder %s167, %s169
      %p173 = scmp.eq.s32.totalorder %s16, 0
      %p174 = por %p172, %p173
      %p175 = scmp.ne.s32.totalorder %s167, %s169
      %p176 = scmp.eq.s32.totalorder %s21, 3
      %p177 = por %p175, %p176
      %p178 = scmp.ne.s32.totalorder %s169, %s170
      %p179 = scmp.eq.s32.totalorder %s21, 0
      %p180 = por %p178, %p179
      %p181 = scmp.ne.s32.totalorder %s169, %s170
      %p182 = scmp.eq.s32.totalorder %s22, 3
      %p183 = por %p181, %p182
      %p185 = scmp.ne.s32.totalorder %s170, %s184
      %p186 = scmp.eq.s32.totalorder %s22, 0
      %p187 = por %p185, %p186
      %s189 = sadd.s32 %s188, 1
      %p192 = scmp.eq.s32.totalorder %s16, 3
      %p193 = scmp.ne.s32.totalorder %s188, %s190
      %p194 = scmp.eq.s32.totalorder %s16, 0
      %p195 = por %p193, %p194
      %p196 = scmp.ne.s32.totalorder %s188, %s190
      %p197 = scmp.eq.s32.totalorder %s21, 3
      %p198 = por %p196, %p197
      %p199 = scmp.ne.s32.totalorder %s190, %s191
      %p200 = scmp.eq.s32.totalorder %s21, 0
      %p201 = por %p199, %p200
      %p202 = scmp.ne.s32.totalorder %s190, %s191
      %p203 = scmp.eq.s32.totalorder %s22, 3
      %p204 = por %p202, %p203
      %p206 = scmp.ne.s32.totalorder %s191, %s205
      %p207 = scmp.eq.s32.totalorder %s22, 0
      %p208 = por %p206, %p207
      %s210 = sadd.s32 %s209, 1
      %p213 = scmp.eq.s32.totalorder %s16, 3
      %p214 = scmp.ne.s32.totalorder %s209, %s211
      %p215 = scmp.eq.s32.totalorder %s16, 0
      %p216 = por %p214, %p215
      %p217 = scmp.ne.s32.totalorder %s209, %s211
      %p218 = scmp.eq.s32.totalorder %s21, 3
      %p219 = por %p217, %p218
      %p220 = scmp.ne.s32.totalorder %s211, %s212
      %p221 = scmp.eq.s32.totalorder %s21, 0
      %p222 = por %p220, %p221
      %p223 = scmp.ne.s32.totalorder %s211, %s212
      %p224 = scmp.eq.s32.totalorder %s22, 3
      %p225 = por %p223, %p224
      %p227 = scmp.ne.s32.totalorder %s212, %s226
      %p228 = scmp.eq.s32.totalorder %s22, 0
      %p229 = por %p227, %p228
      %s230 = ssub.s32 %s23, %s35
      %s231 = ssub.s32 %s24, %s31
      %s232 = sor.u32 %s230, %s231
      %p233 = scmp.eq.s32.totalorder %s232, 0
      %s235 = sadd.s32 %s234, 1
      %s236 = scalar_select %p233, %s234, %s235
      %p239 = pneg %p233
      %p240 = scmp.eq.s32.totalorder %s16, 3
      %p241 = por %p239, %p240
      %p242 = scmp.ne.s32.totalorder %s234, %s237
      %p243 = scmp.eq.s32.totalorder %s16, 0
      %p244 = por %p242, %p243
      %p245 = scmp.ne.s32.totalorder %s234, %s237
      %p246 = scmp.eq.s32.totalorder %s21, 3
      %p247 = por %p245, %p246
      %p248 = scmp.ne.s32.totalorder %s237, %s238
      %p249 = scmp.eq.s32.totalorder %s21, 0
      %p250 = por %p248, %p249
      %p251 = scmp.ne.s32.totalorder %s237, %s238
      %p252 = scmp.eq.s32.totalorder %s22, 3
      %p253 = por %p251, %p252
      %p255 = scmp.ne.s32.totalorder %s238, %s254
      %p256 = scmp.eq.s32.totalorder %s22, 0
      %p257 = por %p255, %p256
      %p258 = scmp.le.s32.totalorder 1, %s16
      %p259 = scmp.lt.s32.totalorder %s16, 5
      %p260 = pnand %p258, %p259
      %p261 = pneg %p260
      // Predicated region
      $region9: #{residual_block_forward.1} parent=5 // pred_check
        _
      $region10: #{residual_block_forward.1} parent=5 // pred_check_branch
        %263 = sbr.rel (%p260) target = $region12
      $region11: #{residual_block_forward.1} parent=5 // pred_region
        %s264 = ssub.s32 %s16, 1
        // Predicated region
        $region13: #{residual_block_forward.1} parent=11 // pred_check
          %p265 = pneg %p75
        $region14: #{residual_block_forward.1} parent=11 // pred_check_branch
          %267 = sbr.rel (%p265) target = $region16
        $region15: #{residual_block_forward.1} parent=11 // pred_region
          _
        $region16: #{residual_block_forward.1} parent=11 // pred_fallthru
          _
        // Predicated region
        $region17: #{residual_block_forward.1} parent=11 // pred_check
          %p268 = pneg %p96
        $region18: #{residual_block_forward.1} parent=11 // pred_check_branch
          %270 = sbr.rel (%p268) target = $region20
        $region19: #{residual_block_forward.1} parent=11 // pred_region
          _
        $region20: #{residual_block_forward.1} parent=11 // pred_fallthru
          _
        // Predicated region
        $region21: #{residual_block_forward.1} parent=11 // pred_check
          %p271 = pneg %p117
        $region22: #{residual_block_forward.1} parent=11 // pred_check_branch
          %273 = sbr.rel (%p271) target = $region24
        $region23: #{residual_block_forward.1} parent=11 // pred_region
          _
        $region24: #{residual_block_forward.1} parent=11 // pred_fallthru
          _
        // Predicated region
        $region25: #{residual_block_forward.1} parent=11 // pred_check
          %p274 = pneg %p138
        $region26: #{residual_block_forward.1} parent=11 // pred_check_branch
          %276 = sbr.rel (%p274) target = $region28
        $region27: #{residual_block_forward.1} parent=11 // pred_region
          _
        $region28: #{residual_block_forward.1} parent=11 // pred_fallthru
          _
        // Predicated region
        $region29: #{residual_block_forward.1} parent=11 // pred_check
          %p277 = pneg %p159
        $region30: #{residual_block_forward.1} parent=11 // pred_check_branch
          %279 = sbr.rel (%p277) target = $region32
        $region31: #{residual_block_forward.1} parent=11 // pred_region
          _
        $region32: #{residual_block_forward.1} parent=11 // pred_fallthru
          _
        // Predicated region
        $region33: #{residual_block_forward.1} parent=11 // pred_check
          %p280 = pneg %p180
        $region34: #{residual_block_forward.1} parent=11 // pred_check_branch
          %282 = sbr.rel (%p280) target = $region36
        $region35: #{residual_block_forward.1} parent=11 // pred_region
          _
        $region36: #{residual_block_forward.1} parent=11 // pred_fallthru
          _
        // Predicated region
        $region37: #{residual_block_forward.1} parent=11 // pred_check
          %p283 = pneg %p201
        $region38: #{residual_block_forward.1} parent=11 // pred_check_branch
          %285 = sbr.rel (%p283) target = $region40
        $region39: #{residual_block_forward.1} parent=11 // pred_region
          _
        $region40: #{residual_block_forward.1} parent=11 // pred_fallthru
          _
        // Predicated region
        $region41: #{residual_block_forward.1} parent=11 // pred_check
          %p286 = pneg %p222
        $region42: #{residual_block_forward.1} parent=11 // pred_check_branch
          %288 = sbr.rel (%p286) target = $region44
        $region43: #{residual_block_forward.1} parent=11 // pred_region
          %290 = vsyncadd [#allocation6], 0
          %s292 = sshll.u32 %s8, 4
          %s293 = int_to_ptr.vmem [resolvable:$true] %s292
          %295 = dma.vmem_to_smem %s293, 16, [#allocation5], [#allocation6]
        $region44: #{residual_block_forward.1} parent=11 // pred_fallthru
          _
      $region12: #{residual_block_forward.1} parent=5 // pred_fallthru
        _
      %p296 = scmp.lt.s32.totalorder %s16, 4
      // Predicated region
      $region45: #{residual_block_forward.1} parent=5 // pred_check
        %p297 = pneg %p296
      $region46: #{residual_block_forward.1} parent=5 // pred_check_branch
        %299 = sbr.rel (%p297) target = $region48
      $region47: #{residual_block_forward.1} parent=5 // pred_region
        // Predicated region
        $region49: #{residual_block_forward.1} parent=47 // pred_check
          %p300 = pneg %p48
        $region50: #{residual_block_forward.1} parent=47 // pred_check_branch
          %302 = sbr.rel (%p300) target = $region52
        $region51: #{residual_block_forward.1} parent=47 // pred_region
          %p303 = scmp.lt.s32.totalorder %s23, 1
          %s304 = scalar_select %p303, %s23, 1
          %s305 = smul.addr %s304, 8
          %s306 = smul.addr %s305, 8
          %s307 = scalar_lea.vmem %s0, %s306
        $region52: #{residual_block_forward.1} parent=47 // pred_fallthru
          _
      $region48: #{residual_block_forward.1} parent=5 // pred_fallthru
        _
      %p308 = scmp.le.s32.totalorder 1, %s16
      %p309 = scmp.lt.s32.totalorder %s16, 5
      %p310 = pnand %p308, %p309
      %p311 = pneg %p310
      // Predicated region
      $region53: #{residual_block_forward.1} parent=5 // pred_check
        _
      $region54: #{residual_block_forward.1} parent=5 // pred_check_branch
        %313 = sbr.rel (%p310) target = $region56
      $region55: #{residual_block_forward.1} parent=5 // pred_region
        %s314 = ssub.s32 %s16, 1
        // Predicated region
        $region57: #{residual_block_forward.1} parent=55 // pred_check
          %p315 = pneg %p222
        $region58: #{residual_block_forward.1} parent=55 // pred_check_branch
          %317 = sbr.rel (%p315) target = $region60
        $region59: #{residual_block_forward.1} parent=55 // pred_region
          %319 = dma.done [#allocation6], 16
        $region60: #{residual_block_forward.1} parent=55 // pred_fallthru
          _
        %320 = sfence
        %p321 = scmp.lt.s32.totalorder %s25, 1
        %s322 = scalar_select %p321, %s25, 1
        %s323 = smul.addr %s322, 8
        %s324 = smul.addr %s323, 8
        %s325 = scalar_lea.vmem %s0, %s324
        %p326 = pneg %p54
        %p327 = pneg %p51
        %p328 = pneg %p75
        %p329 = pneg %p72
        %p330 = pneg %p96
        %p331 = pneg %p93
        %p332 = pneg %p117
        %p333 = pneg %p114
        %p334 = pneg %p138
        %p335 = pneg %p135
        %p336 = pneg %p159
        %p337 = pneg %p156
        %p338 = pneg %p180
        %p339 = pneg %p177
        %p340 = pneg %p201
        %p341 = pneg %p198
        %p342 = pneg %p222
        %p343 = pneg %p219
        %p344 = pneg %p250
        %p345 = pneg %p247
        %p346 = scmp.lt.s32.totalorder %s25, 1
        %s347 = scalar_select %p346, %s25, 1
        %p348 = scmp.lt.s32.totalorder %s26, 1
        %s349 = scalar_select %p348, %s26, 1
        %s350 = smul.addr %s347, 2
        %s351 = sadd.s32 %s349, %s350
        %s352 = smul.addr %s351, 2
        %s353 = scalar_lea.vmem %s9, %s352
        %p354 = scmp.lt.s32.totalorder %s25, 1
        %s355 = scalar_select %p354, %s25, 1
        %s356 = smul.addr %s355, 8
        %s357 = smul.addr %s356, 8
        %s358 = scalar_lea.vmem %s0, %s357
        %p359 = scmp.lt.s32.totalorder %s25, 1
        %s360 = scalar_select %p359, %s25, 1
        %p361 = scmp.lt.s32.totalorder %s26, 1
        %s362 = scalar_select %p361, %s26, 1
        %s363 = smul.addr %s360, 2
        %s364 = sadd.s32 %s362, %s363
        %s365 = smul.addr %s364, 2
        %s366 = scalar_lea.vmem %s9, %s365
        %s368 = sld [smem:[#allocation5]]
        %s369 = sld [smem:[#allocation5 + $0x1]]
        %s370 = smul.u32 %s26, 16
        %v371 = vld [vmem:[%s5] sm:$0x1]
        %v373 = vperm.slane %v371, 0
        %vm375 = vcmask 195584
        %376 = vst.msk [vmem:[#allocation2] sm:$0xff] %vm375, %v373
        %377 = vst.msk [vmem:[#allocation2 + $0x8] sm:$0xff] %vm375, %v373
        %378 = vst.msk [vmem:[#allocation2 + $0x10] sm:$0xff] %vm375, %v373
        %vm379 = vcmask 193536
        %380 = vst.msk [vmem:[#allocation2 + $0x18] sm:$0x3f] %vm379, %v373
        %v381 = vld [vmem:[#allocation2] sm:$0xff]
        %v382 = vld [vmem:[#allocation2 + $0x8] sm:$0xff]
        %v383 = vld [vmem:[#allocation2 + $0x10] sm:$0xff]
        %v384 = vld [vmem:[#allocation2 + $0x18] sm:$0x3f]
        %s385 = scalar_lea.vmem %s358, %s370
        %v386 = vld [vmem:[%s385] sm:$0xff]
        %v387 = vld [vmem:[%s385 + $0x8] sm:$0xff]
        %v388 = vld [vmem:[%s385 + $0x10] sm:$0xff]
        %v389 = vld [vmem:[%s385 + $0x18] sm:$0x3f]
        %v390 = vpack.c.bf16 %v387, %v386
        %v391 = vpack.c.bf16 %v389, %v388
        %v392 = vld [vmem:[%s1] sm:$0xf]
        %v393 = vld [vmem:[%s1 + $0x4] sm:$0xf]
        %v394 = vld [vmem:[%s1 + $0x8] sm:$0xf]
        %v395 = vld [vmem:[%s1 + $0xc] sm:$0xf]
        %v400 = vunpack.c.l.b16 %v392
        %v401 = vunpack.c.l.b16 %v393
        %v402 = vunpack.c.l.b16 %v394
        %v403 = vunpack.c.l.b16 %v395
        %v404 = vpack.c.b16 %v401, %v400
        %v405 = vpack.c.b16 %v403, %v402
        %vm408 = vcmask 261120
        %v410 = vsel %vm408, %v390, 0
        %v413 = vsel %vm408, %v391, 0
        %415 = vmatpush.bf16.msra.mxu0 0
        %416 = vmatpush.bf16.msra.mxu0 0
        %417 = vmatpush.bf16.msra.mxu0 0
        %418 = vmatpush.bf16.msra.mxu0 0
        %419 = vmatpush.bf16.msra.mxu0 0
        %420 = vmatpush.bf16.msra.mxu0 0
        %421 = vmatpush.bf16.msra.mxu0 %v405
        %422 = vmatpush.bf16.msra.mxu0 %v404
        %423 = vmatmul.bf16.gmra.mxu0 %v410
        %v424 = vpop.f32.mrf.mxu0
        %v425 = vadd.f32 0.0, %v424
        %v426 = vpop.f32.mrf.mxu0
        %v427 = vadd.f32 0.0, %v426
        %428 = vmatmul.bf16.gmra.mxu0 %v413
        %v429 = vpop.f32.mrf.mxu0
        %v430 = vadd.f32 0.0, %v429
        %v431 = vpop.f32.mrf.mxu0
        %v432 = vadd.f32 0.0, %v431
        %433 = vdwg.mxu0
        %v434 = vadd.f32 %v381, %v425
        %v435 = vadd.f32 %v382, %v427
        %v436 = vadd.f32 %v383, %v430
        %v437 = vadd.f32 %v384, %v432
        %438 = vst.msk [vmem:[#allocation2] sm:$0xff] %vm375, %v434
        %439 = vst.msk [vmem:[#allocation2 + $0x8] sm:$0xff] %vm375, %v435
        %440 = vst.msk [vmem:[#allocation2 + $0x10] sm:$0xff] %vm375, %v436
        %441 = vst.msk [vmem:[#allocation2 + $0x18] sm:$0x3f] %vm379, %v437
        %v442 = vld [vmem:[#allocation2] sm:$0xff]
        %v443 = vld [vmem:[#allocation2 + $0x8] sm:$0xff]
        %v444 = vld [vmem:[#allocation2 + $0x10] sm:$0xff]
        %v445 = vld [vmem:[#allocation2 + $0x18] sm:$0x3f]
        %s446 = sadd.s32 %s370, 1
        %s447 = scalar_lea.vmem %s358, %s446
        %v448 = vld [vmem:[%s447] sm:$0xff]
        %v449 = vld [vmem:[%s447 + $0x8] sm:$0xff]
        %v450 = vld [vmem:[%s447 + $0x10] sm:$0xff]
        %v451 = vld [vmem:[%s447 + $0x18] sm:$0x3f]
        %v452 = vpack.c.bf16 %v449, %v448
        %v453 = vpack.c.bf16 %v451, %v450
        %s454 = scalar_lea.vmem %s1, 16
        %v455 = vld [vmem:[%s454] sm:$0xf]
        %v456 = vld [vmem:[%s454 + $0x4] sm:$0xf]
        %v457 = vld [vmem:[%s454 + $0x8] sm:$0xf]
        %v458 = vld [vmem:[%s454 + $0xc] sm:$0xf]
        %v463 = vunpack.c.l.b16 %v455
        %v464 = vunpack.c.l.b16 %v456
        %v465 = vunpack.c.l.b16 %v457
        %v466 = vunpack.c.l.b16 %v458
        %v467 = vpack.c.b16 %v464, %v463
        %v468 = vpack.c.b16 %v466, %v465
        %v472 = vsel %vm408, %v452, 0
        %v475 = vsel %vm408, %v453, 0
        %477 = vmatpush.bf16.msra.mxu0 0
        %478 = vmatpush.bf16.msra.mxu0 0
        %479 = vmatpush.bf16.msra.mxu0 0
        %480 = vmatpush.bf16.msra.mxu0 0
        %481 = vmatpush.bf16.msra.mxu0 0
        %482 = vmatpush.bf16.msra.mxu0 0
        %483 = vmatpush.bf16.msra.mxu0 %v468
        %484 = vmatpush.bf16.msra.mxu0 %v467
        %485 = vmatmul.bf16.gmra.mxu0 %v472
        %v486 = vpop.f32.mrf.mxu0
        %v487 = vadd.f32 0.0, %v486
        %v488 = vpop.f32.mrf.mxu0
        %v489 = vadd.f32 0.0, %v488
        %490 = vmatmul.bf16.gmra.mxu0 %v475
        %v491 = vpop.f32.mrf.mxu0
        %v492 = vadd.f32 0.0, %v491
        %v493 = vpop.f32.mrf.mxu0
        %v494 = vadd.f32 0.0, %v493
        %495 = vdwg.mxu0
        %v496 = vadd.f32 %v442, %v487
        %v497 = vadd.f32 %v443, %v489
        %v498 = vadd.f32 %v444, %v492
        %v499 = vadd.f32 %v445, %v494
        %500 = vst.msk [vmem:[#allocation2] sm:$0xff] %vm375, %v496
        %501 = vst.msk [vmem:[#allocation2 + $0x8] sm:$0xff] %vm375, %v497
        %502 = vst.msk [vmem:[#allocation2 + $0x10] sm:$0xff] %vm375, %v498
        %503 = vst.msk [vmem:[#allocation2 + $0x18] sm:$0x3f] %vm379, %v499
        %v504 = vld [vmem:[#allocation2] sm:$0xff]
        %v505 = vld [vmem:[#allocation2 + $0x8] sm:$0xff]
        %v506 = vld [vmem:[#allocation2 + $0x10] sm:$0xff]
        %v507 = vld [vmem:[#allocation2 + $0x18] sm:$0x3f]
        %s508 = sadd.s32 %s370, 2
        %s509 = scalar_lea.vmem %s358, %s508
        %v510 = vld [vmem:[%s509] sm:$0xff]
        %v511 = vld [vmem:[%s509 + $0x8] sm:$0xff]
        %v512 = vld [vmem:[%s509 + $0x10] sm:$0xff]
        %v513 = vld [vmem:[%s509 + $0x18] sm:$0x3f]
        %v514 = vpack.c.bf16 %v511, %v510
        %v515 = vpack.c.bf16 %v513, %v512
        %s516 = scalar_lea.vmem %s1, 32
        %v517 = vld [vmem:[%s516] sm:$0xf]
        %v518 = vld [vmem:[%s516 + $0x4] sm:$0xf]
        %v519 = vld [vmem:[%s516 + $0x8] sm:$0xf]
        %v520 = vld [vmem:[%s516 + $0xc] sm:$0xf]
        %v525 = vunpack.c.l.b16 %v517
        %v526 = vunpack.c.l.b16 %v518
        %v527 = vunpack.c.l.b16 %v519
        %v528 = vunpack.c.l.b16 %v520
        %v529 = vpack.c.b16 %v526, %v525
        %v530 = vpack.c.b16 %v528, %v527
        %v534 = vsel %vm408, %v514, 0
        %v537 = vsel %vm408, %v515, 0
        %539 = vmatpush.bf16.msra.mxu0 0
        %540 = vmatpush.bf16.msra.mxu0 0
        %541 = vmatpush.bf16.msra.mxu0 0
        %542 = vmatpush.bf16.msra.mxu0 0
        %543 = vmatpush.bf16.msra.mxu0 0
        %544 = vmatpush.bf16.msra.mxu0 0
        %545 = vmatpush.bf16.msra.mxu0 %v530
        %546 = vmatpush.bf16.msra.mxu0 %v529
        %547 = vmatmul.bf16.gmra.mxu0 %v534
        %v548 = vpop.f32.mrf.mxu0
        %v549 = vadd.f32 0.0, %v548
        %v550 = vpop.f32.mrf.mxu0
        %v551 = vadd.f32 0.0, %v550
        %552 = vmatmul.bf16.gmra.mxu0 %v537
        %v553 = vpop.f32.mrf.mxu0
        %v554 = vadd.f32 0.0, %v553
        %v555 = vpop.f32.mrf.mxu0
        %v556 = vadd.f32 0.0, %v555
        %557 = vdwg.mxu0
        %v558 = vadd.f32 %v504, %v549
        %v559 = vadd.f32 %v505, %v551
        %v560 = vadd.f32 %v506, %v554
        %v561 = vadd.f32 %v507, %v556
        %562 = vst.msk [vmem:[#allocation2] sm:$0xff] %vm375, %v558
        %563 = vst.msk [vmem:[#allocation2 + $0x8] sm:$0xff] %vm375, %v559
        %564 = vst.msk [vmem:[#allocation2 + $0x10] sm:$0xff] %vm375, %v560
        %565 = vst.msk [vmem:[#allocation2 + $0x18] sm:$0x3f] %vm379, %v561
        %v566 = vld [vmem:[#allocation2] sm:$0xff]
        %v567 = vld [vmem:[#allocation2 + $0x8] sm:$0xff]
        %v568 = vld [vmem:[#allocation2 + $0x10] sm:$0xff]
        %v569 = vld [vmem:[#allocation2 + $0x18] sm:$0x3f]
        %s570 = sadd.s32 %s370, 8
        %s571 = scalar_lea.vmem %s358, %s570
        %v572 = vld [vmem:[%s571] sm:$0xff]
        %v573 = vld [vmem:[%s571 + $0x8] sm:$0xff]
        %v574 = vld [vmem:[%s571 + $0x10] sm:$0xff]
        %v575 = vld [vmem:[%s571 + $0x18] sm:$0x3f]
        %v576 = vpack.c.bf16 %v573, %v572
        %v577 = vpack.c.bf16 %v575, %v574
        %s578 = scalar_lea.vmem %s1, 48
        %v579 = vld [vmem:[%s578] sm:$0xf]
        %v580 = vld [vmem:[%s578 + $0x4] sm:$0xf]
        %v581 = vld [vmem:[%s578 + $0x8] sm:$0xf]
        %v582 = vld [vmem:[%s578 + $0xc] sm:$0xf]
        %v587 = vunpack.c.l.b16 %v579
        %v588 = vunpack.c.l.b16 %v580
        %v589 = vunpack.c.l.b16 %v581
        %v590 = vunpack.c.l.b16 %v582
        %v591 = vpack.c.b16 %v588, %v587
        %v592 = vpack.c.b16 %v590, %v589
        %v596 = vsel %vm408, %v576, 0
        %v599 = vsel %vm408, %v577, 0
        %601 = vmatpush.bf16.msra.mxu0 0
        %602 = vmatpush.bf16.msra.mxu0 0
        %603 = vmatpush.bf16.msra.mxu0 0
        %604 = vmatpush.bf16.msra.mxu0 0
        %605 = vmatpush.bf16.msra.mxu0 0
        %606 = vmatpush.bf16.msra.mxu0 0
        %607 = vmatpush.bf16.msra.mxu0 %v592
        %608 = vmatpush.bf16.msra.mxu0 %v591
        %609 = vmatmul.bf16.gmra.mxu0 %v596
        %v610 = vpop.f32.mrf.mxu0
        %v611 = vadd.f32 0.0, %v610
        %v612 = vpop.f32.mrf.mxu0
        %v613 = vadd.f32 0.0, %v612
        %614 = vmatmul.bf16.gmra.mxu0 %v599
        %v615 = vpop.f32.mrf.mxu0
        %v616 = vadd.f32 0.0, %v615
        %v617 = vpop.f32.mrf.mxu0
        %v618 = vadd.f32 0.0, %v617
        %619 = vdwg.mxu0
        %v620 = vadd.f32 %v566, %v611
        %v621 = vadd.f32 %v567, %v613
        %v622 = vadd.f32 %v568, %v616
        %v623 = vadd.f32 %v569, %v618
        %624 = vst.msk [vmem:[#allocation2] sm:$0xff] %vm375, %v620
        %625 = vst.msk [vmem:[#allocation2 + $0x8] sm:$0xff] %vm375, %v621
        %626 = vst.msk [vmem:[#allocation2 + $0x10] sm:$0xff] %vm375, %v622
        %627 = vst.msk [vmem:[#allocation2 + $0x18] sm:$0x3f] %vm379, %v623
        %v628 = vld [vmem:[#allocation2] sm:$0xff]
        %v629 = vld [vmem:[#allocation2 + $0x8] sm:$0xff]
        %v630 = vld [vmem:[#allocation2 + $0x10] sm:$0xff]
        %v631 = vld [vmem:[#allocation2 + $0x18] sm:$0x3f]
        %s632 = sadd.s32 %s370, 9
        %s633 = scalar_lea.vmem %s358, %s632
        %v634 = vld [vmem:[%s633] sm:$0xff]
        %v635 = vld [vmem:[%s633 + $0x8] sm:$0xff]
        %v636 = vld [vmem:[%s633 + $0x10] sm:$0xff]
        %v637 = vld [vmem:[%s633 + $0x18] sm:$0x3f]
        %v638 = vpack.c.bf16 %v635, %v634
        %v639 = vpack.c.bf16 %v637, %v636
        %s640 = scalar_lea.vmem %s1, 64
        %v641 = vld [vmem:[%s640] sm:$0xf]
        %v642 = vld [vmem:[%s640 + $0x4] sm:$0xf]
        %v643 = vld [vmem:[%s640 + $0x8] sm:$0xf]
        %v644 = vld [vmem:[%s640 + $0xc] sm:$0xf]
        %v649 = vunpack.c.l.b16 %v641
        %v650 = vunpack.c.l.b16 %v642
        %v651 = vunpack.c.l.b16 %v643
        %v652 = vunpack.c.l.b16 %v644
        %v653 = vpack.c.b16 %v650, %v649
        %v654 = vpack.c.b16 %v652, %v651
        %v658 = vsel %vm408, %v638, 0
        %v661 = vsel %vm408, %v639, 0
        %663 = vmatpush.bf16.msra.mxu0 0
        %664 = vmatpush.bf16.msra.mxu0 0
        %665 = vmatpush.bf16.msra.mxu0 0
        %666 = vmatpush.bf16.msra.mxu0 0
        %667 = vmatpush.bf16.msra.mxu0 0
        %668 = vmatpush.bf16.msra.mxu0 0
        %669 = vmatpush.bf16.msra.mxu0 %v654
        %670 = vmatpush.bf16.msra.mxu0 %v653
        %671 = vmatmul.bf16.gmra.mxu0 %v658
        %v672 = vpop.f32.mrf.mxu0
        %v673 = vadd.f32 0.0, %v672
        %v674 = vpop.f32.mrf.mxu0
        %v675 = vadd.f32 0.0, %v674
        %676 = vmatmul.bf16.gmra.mxu0 %v661
        %v677 = vpop.f32.mrf.mxu0
        %v678 = vadd.f32 0.0, %v677
        %v679 = vpop.f32.mrf.mxu0
        %v680 = vadd.f32 0.0, %v679
        %681 = vdwg.mxu0
        %v682 = vadd.f32 %v628, %v673
        %v683 = vadd.f32 %v629, %v675
        %v684 = vadd.f32 %v630, %v678
        %v685 = vadd.f32 %v631, %v680
        %686 = vst.msk [vmem:[#allocation2] sm:$0xff] %vm375, %v682
        %687 = vst.msk [vmem:[#allocation2 + $0x8] sm:$0xff] %vm375, %v683
        %688 = vst.msk [vmem:[#allocation2 + $0x10] sm:$0xff] %vm375, %v684
        %689 = vst.msk [vmem:[#allocation2 + $0x18] sm:$0x3f] %vm379, %v685
        %v690 = vld [vmem:[#allocation2] sm:$0xff]
        %v691 = vld [vmem:[#allocation2 + $0x8] sm:$0xff]
        %v692 = vld [vmem:[#allocation2 + $0x10] sm:$0xff]
        %v693 = vld [vmem:[#allocation2 + $0x18] sm:$0x3f]
        %s694 = sadd.s32 %s370, 10
        %s695 = scalar_lea.vmem %s358, %s694
        %v696 = vld [vmem:[%s695] sm:$0xff]
        %v697 = vld [vmem:[%s695 + $0x8] sm:$0xff]
        %v698 = vld [vmem:[%s695 + $0x10] sm:$0xff]
        %v699 = vld [vmem:[%s695 + $0x18] sm:$0x3f]
        %v700 = vpack.c.bf16 %v697, %v696
        %v701 = vpack.c.bf16 %v699, %v698
        %s702 = scalar_lea.vmem %s1, 80
        %v703 = vld [vmem:[%s702] sm:$0xf]
        %v704 = vld [vmem:[%s702 + $0x4] sm:$0xf]
        %v705 = vld [vmem:[%s702 + $0x8] sm:$0xf]
        %v706 = vld [vmem:[%s702 + $0xc] sm:$0xf]
        %v711 = vunpack.c.l.b16 %v703
        %v712 = vunpack.c.l.b16 %v704
        %v713 = vunpack.c.l.b16 %v705
        %v714 = vunpack.c.l.b16 %v706
        %v715 = vpack.c.b16 %v712, %v711
        %v716 = vpack.c.b16 %v714, %v713
        %v720 = vsel %vm408, %v700, 0
        %v723 = vsel %vm408, %v701, 0
        %725 = vmatpush.bf16.msra.mxu0 0
        %726 = vmatpush.bf16.msra.mxu0 0
        %727 = vmatpush.bf16.msra.mxu0 0
        %728 = vmatpush.bf16.msra.mxu0 0
        %729 = vmatpush.bf16.msra.mxu0 0
        %730 = vmatpush.bf16.msra.mxu0 0
        %731 = vmatpush.bf16.msra.mxu0 %v716
        %732 = vmatpush.bf16.msra.mxu0 %v715
        %733 = vmatmul.bf16.gmra.mxu0 %v720
        %v734 = vpop.f32.mrf.mxu0
        %v735 = vadd.f32 0.0, %v734
        %v736 = vpop.f32.mrf.mxu0
        %v737 = vadd.f32 0.0, %v736
        %738 = vmatmul.bf16.gmra.mxu0 %v723
        %v739 = vpop.f32.mrf.mxu0
        %v740 = vadd.f32 0.0, %v739
        %v741 = vpop.f32.mrf.mxu0
        %v742 = vadd.f32 0.0, %v741
        %743 = vdwg.mxu0
        %v744 = vadd.f32 %v690, %v735
        %v745 = vadd.f32 %v691, %v737
        %v746 = vadd.f32 %v692, %v740
        %v747 = vadd.f32 %v693, %v742
        %748 = vst.msk [vmem:[#allocation2] sm:$0xff] %vm375, %v744
        %749 = vst.msk [vmem:[#allocation2 + $0x8] sm:$0xff] %vm375, %v745
        %750 = vst.msk [vmem:[#allocation2 + $0x10] sm:$0xff] %vm375, %v746
        %751 = vst.msk [vmem:[#allocation2 + $0x18] sm:$0x3f] %vm379, %v747
        %v752 = vld [vmem:[#allocation2] sm:$0xff]
        %v753 = vld [vmem:[#allocation2 + $0x8] sm:$0xff]
        %v754 = vld [vmem:[#allocation2 + $0x10] sm:$0xff]
        %v755 = vld [vmem:[#allocation2 + $0x18] sm:$0x3f]
        %s756 = sadd.s32 %s370, 16
        %s757 = scalar_lea.vmem %s358, %s756
        %v758 = vld [vmem:[%s757] sm:$0xff]
        %v759 = vld [vmem:[%s757 + $0x8] sm:$0xff]
        %v760 = vld [vmem:[%s757 + $0x10] sm:$0xff]
        %v761 = vld [vmem:[%s757 + $0x18] sm:$0x3f]
        %v762 = vpack.c.bf16 %v759, %v758
        %v763 = vpack.c.bf16 %v761, %v760
        %s764 = scalar_lea.vmem %s1, 96
        %v765 = vld [vmem:[%s764] sm:$0xf]
        %v766 = vld [vmem:[%s764 + $0x4] sm:$0xf]
        %v767 = vld [vmem:[%s764 + $0x8] sm:$0xf]
        %v768 = vld [vmem:[%s764 + $0xc] sm:$0xf]
        %v773 = vunpack.c.l.b16 %v765
        %v774 = vunpack.c.l.b16 %v766
        %v775 = vunpack.c.l.b16 %v767
        %v776 = vunpack.c.l.b16 %v768
        %v777 = vpack.c.b16 %v774, %v773
        %v778 = vpack.c.b16 %v776, %v775
        %v782 = vsel %vm408, %v762, 0
        %v785 = vsel %vm408, %v763, 0
        %787 = vmatpush.bf16.msra.mxu0 0
        %788 = vmatpush.bf16.msra.mxu0 0
        %789 = vmatpush.bf16.msra.mxu0 0
        %790 = vmatpush.bf16.msra.mxu0 0
        %791 = vmatpush.bf16.msra.mxu0 0
        %792 = vmatpush.bf16.msra.mxu0 0
        %793 = vmatpush.bf16.msra.mxu0 %v778
        %794 = vmatpush.bf16.msra.mxu0 %v777
        %795 = vmatmul.bf16.gmra.mxu0 %v782
        %v796 = vpop.f32.mrf.mxu0
        %v797 = vadd.f32 0.0, %v796
        %v798 = vpop.f32.mrf.mxu0
        %v799 = vadd.f32 0.0, %v798
        %800 = vmatmul.bf16.gmra.mxu0 %v785
        %v801 = vpop.f32.mrf.mxu0
        %v802 = vadd.f32 0.0, %v801
        %v803 = vpop.f32.mrf.mxu0
        %v804 = vadd.f32 0.0, %v803
        %805 = vdwg.mxu0
        %v806 = vadd.f32 %v752, %v797
        %v807 = vadd.f32 %v753, %v799
        %v808 = vadd.f32 %v754, %v802
        %v809 = vadd.f32 %v755, %v804
        %810 = vst.msk [vmem:[#allocation2] sm:$0xff] %vm375, %v806
        %811 = vst.msk [vmem:[#allocation2 + $0x8] sm:$0xff] %vm375, %v807
        %812 = vst.msk [vmem:[#allocation2 + $0x10] sm:$0xff] %vm375, %v808
        %813 = vst.msk [vmem:[#allocation2 + $0x18] sm:$0x3f] %vm379, %v809
        %v814 = vld [vmem:[#allocation2] sm:$0xff]
        %v815 = vld [vmem:[#allocation2 + $0x8] sm:$0xff]
        %v816 = vld [vmem:[#allocation2 + $0x10] sm:$0xff]
        %v817 = vld [vmem:[#allocation2 + $0x18] sm:$0x3f]
        %s818 = sadd.s32 %s370, 17
        %s819 = scalar_lea.vmem %s358, %s818
        %v820 = vld [vmem:[%s819] sm:$0xff]
        %v821 = vld [vmem:[%s819 + $0x8] sm:$0xff]
        %v822 = vld [vmem:[%s819 + $0x10] sm:$0xff]
        %v823 = vld [vmem:[%s819 + $0x18] sm:$0x3f]
        %v824 = vpack.c.bf16 %v821, %v820
        %v825 = vpack.c.bf16 %v823, %v822
        %s826 = scalar_lea.vmem %s1, 112
        %v827 = vld [vmem:[%s826] sm:$0xf]
        %v828 = vld [vmem:[%s826 + $0x4] sm:$0xf]
        %v829 = vld [vmem:[%s826 + $0x8] sm:$0xf]
        %v830 = vld [vmem:[%s826 + $0xc] sm:$0xf]
        %v835 = vunpack.c.l.b16 %v827
        %v836 = vunpack.c.l.b16 %v828
        %v837 = vunpack.c.l.b16 %v829
        %v838 = vunpack.c.l.b16 %v830
        %v839 = vpack.c.b16 %v836, %v835
        %v840 = vpack.c.b16 %v838, %v837
        %v844 = vsel %vm408, %v824, 0
        %v847 = vsel %vm408, %v825, 0
        %849 = vmatpush.bf16.msra.mxu0 0
        %850 = vmatpush.bf16.msra.mxu0 0
        %851 = vmatpush.bf16.msra.mxu0 0
        %852 = vmatpush.bf16.msra.mxu0 0
        %853 = vmatpush.bf16.msra.mxu0 0
        %854 = vmatpush.bf16.msra.mxu0 0
        %855 = vmatpush.bf16.msra.mxu0 %v840
        %856 = vmatpush.bf16.msra.mxu0 %v839
        %857 = vmatmul.bf16.gmra.mxu0 %v844
        %v858 = vpop.f32.mrf.mxu0
        %v859 = vadd.f32 0.0, %v858
        %v860 = vpop.f32.mrf.mxu0
        %v861 = vadd.f32 0.0, %v860
        %862 = vmatmul.bf16.gmra.mxu0 %v847
        %v863 = vpop.f32.mrf.mxu0
        %v864 = vadd.f32 0.0, %v863
        %v865 = vpop.f32.mrf.mxu0
        %v866 = vadd.f32 0.0, %v865
        %867 = vdwg.mxu0
        %v868 = vadd.f32 %v814, %v859
        %v869 = vadd.f32 %v815, %v861
        %v870 = vadd.f32 %v816, %v864
        %v871 = vadd.f32 %v817, %v866
        %872 = vst.msk [vmem:[#allocation2] sm:$0xff] %vm375, %v868
        %873 = vst.msk [vmem:[#allocation2 + $0x8] sm:$0xff] %vm375, %v869
        %874 = vst.msk [vmem:[#allocation2 + $0x10] sm:$0xff] %vm375, %v870
        %875 = vst.msk [vmem:[#allocation2 + $0x18] sm:$0x3f] %vm379, %v871
        %v876 = vld [vmem:[#allocation2] sm:$0xff]
        %v877 = vld [vmem:[#allocation2 + $0x8] sm:$0xff]
        %v878 = vld [vmem:[#allocation2 + $0x10] sm:$0xff]
        %v879 = vld [vmem:[#allocation2 + $0x18] sm:$0x3f]
        %s880 = sadd.s32 %s370, 18
        %s881 = scalar_lea.vmem %s358, %s880
        %v882 = vld [vmem:[%s881] sm:$0xff]
        %v883 = vld [vmem:[%s881 + $0x8] sm:$0xff]
        %v884 = vld [vmem:[%s881 + $0x10] sm:$0xff]
        %v885 = vld [vmem:[%s881 + $0x18] sm:$0x3f]
        %v886 = vpack.c.bf16 %v883, %v882
        %v887 = vpack.c.bf16 %v885, %v884
        %s888 = scalar_lea.vmem %s1, 128
        %v889 = vld [vmem:[%s888] sm:$0xf]
        %v890 = vld [vmem:[%s888 + $0x4] sm:$0xf]
        %v891 = vld [vmem:[%s888 + $0x8] sm:$0xf]
        %v892 = vld [vmem:[%s888 + $0xc] sm:$0xf]
        %v897 = vunpack.c.l.b16 %v889
        %v898 = vunpack.c.l.b16 %v890
        %v899 = vunpack.c.l.b16 %v891
        %v900 = vunpack.c.l.b16 %v892
        %v901 = vpack.c.b16 %v898, %v897
        %v902 = vpack.c.b16 %v900, %v899
        %v906 = vsel %vm408, %v886, 0
        %v909 = vsel %vm408, %v887, 0
        %911 = vmatpush.bf16.msra.mxu0 0
        %912 = vmatpush.bf16.msra.mxu0 0
        %913 = vmatpush.bf16.msra.mxu0 0
        %914 = vmatpush.bf16.msra.mxu0 0
        %915 = vmatpush.bf16.msra.mxu0 0
        %916 = vmatpush.bf16.msra.mxu0 0
        %917 = vmatpush.bf16.msra.mxu0 %v902
        %918 = vmatpush.bf16.msra.mxu0 %v901
        %919 = vmatmul.bf16.gmra.mxu0 %v906
        %v920 = vpop.f32.mrf.mxu0
        %v921 = vadd.f32 0.0, %v920
        %v922 = vpop.f32.mrf.mxu0
        %v923 = vadd.f32 0.0, %v922
        %924 = vmatmul.bf16.gmra.mxu0 %v909
        %v925 = vpop.f32.mrf.mxu0
        %v926 = vadd.f32 0.0, %v925
        %v927 = vpop.f32.mrf.mxu0
        %v928 = vadd.f32 0.0, %v927
        %929 = vdwg.mxu0
        %v930 = vadd.f32 %v876, %v921
        %v931 = vadd.f32 %v877, %v923
        %v932 = vadd.f32 %v878, %v926
        %v933 = vadd.f32 %v879, %v928
        %934 = vst.msk [vmem:[#allocation2] sm:$0xff] %vm375, %v930
        %935 = vst.msk [vmem:[#allocation2 + $0x8] sm:$0xff] %vm375, %v931
        %936 = vst.msk [vmem:[#allocation2 + $0x10] sm:$0xff] %vm375, %v932
        %937 = vst.msk [vmem:[#allocation2 + $0x18] sm:$0x3f] %vm379, %v933
        %v938 = vld [vmem:[#allocation2] sm:$0xff]
        %v939 = vld [vmem:[#allocation2 + $0x8] sm:$0xff]
        %v940 = vld [vmem:[#allocation2 + $0x10] sm:$0xff]
        %v941 = vld [vmem:[#allocation2 + $0x18] sm:$0x3f]
        %vm942 = vcmp.ge.f32.partialorder %v938, 0.0
        %vm943 = vcmp.ge.f32.partialorder %v939, 0.0
        %vm944 = vcmp.ge.f32.partialorder %v940, 0.0
        %vm945 = vcmp.ge.f32.partialorder %v941, 0.0
        %v946 = vstv %s368
        %v947 = vmul.f32 %v946, %v938
        %v948 = vmul.f32 %v946, %v939
        %v949 = vmul.f32 %v946, %v940
        %v950 = vmul.f32 %v946, %v941
        %v951 = vsel %vm942, %v938, %v947
        %v952 = vsel %vm943, %v939, %v948
        %v953 = vsel %vm944, %v940, %v949
        %v954 = vsel %vm945, %v941, %v950
        %955 = vst.msk [vmem:[#allocation2] sm:$0xff] %vm375, %v951
        %956 = vst.msk [vmem:[#allocation2 + $0x8] sm:$0xff] %vm375, %v952
        %957 = vst.msk [vmem:[#allocation2 + $0x10] sm:$0xff] %vm375, %v953
        %958 = vst.msk [vmem:[#allocation2 + $0x18] sm:$0x3f] %vm379, %v954
        %v959 = vld [vmem:[%s6] sm:$0x1]
        %v961 = vperm.slane %v959, 0
        %963 = vst.msk [vmem:[#allocation3] sm:$0xff] %vm408, %v961
        %vm964 = vcmask 257024
        %965 = vst.msk [vmem:[#allocation3 + $0x8] sm:$0xf] %vm964, %v961
        %v966 = vld [vmem:[#allocation3] sm:$0xff]
        %v967 = vld [vmem:[#allocation3 + $0x8] sm:$0xf]
        %v968 = vld [vmem:[#allocation2] sm:$0xff]
        %v969 = vld [vmem:[#allocation2 + $0x8] sm:$0xf]
        %v970 = vpack.c.bf16 %v969, %v968
        %v971 = vld [vmem:[%s2] sm:$0xf]
        %v972 = vld [vmem:[%s2 + $0x4] sm:$0xf]
        %v973 = vld [vmem:[%s2 + $0x8] sm:$0xf]
        %v977 = vunpack.c.l.b16 %v971
        %v978 = vunpack.c.l.b16 %v972
        %v979 = vunpack.c.l.b16 %v973
        %v980 = vpack.c.b16 %v978, %v977
        %v981 = vpack.c.b16 %v979, %v979
        %v984 = vsel %vm375, %v970, 0
        %vm986 = vcmask 1043456
        %v988 = vsel %vm986, %v981, 0
        %990 = vmatpush.bf16.msra.mxu0 0
        %991 = vmatpush.bf16.msra.mxu0 0
        %992 = vmatpush.bf16.msra.mxu0 0
        %993 = vmatpush.bf16.msra.mxu0 0
        %994 = vmatpush.bf16.msra.mxu0 0
        %995 = vmatpush.bf16.msra.mxu0 0
        %996 = vmatpush.bf16.msra.mxu0 %v988
        %997 = vmatpush.bf16.msra.mxu0 %v980
        %998 = vmatmul.bf16.gmra.mxu0 %v984
        %v999 = vpop.f32.mrf.mxu0
        %v1000 = vadd.f32 0.0, %v999
        %v1001 = vpop.f32.mrf.mxu0
        %v1002 = vadd.f32 0.0, %v1001
        %1003 = vdwg.mxu0
        %v1004 = vadd.f32 %v966, %v1000
        %v1005 = vadd.f32 %v967, %v1002
        %1006 = vst.msk [vmem:[#allocation3] sm:$0xff] %vm408, %v1004
        %1007 = vst.msk [vmem:[#allocation3 + $0x8] sm:$0xf] %vm964, %v1005
        %v1008 = vld [vmem:[#allocation3] sm:$0xff]
        %v1009 = vld [vmem:[#allocation3 + $0x8] sm:$0xf]
        %v1010 = vld [vmem:[#allocation2 + $0x1] sm:$0xff]
        %v1011 = vld [vmem:[#allocation2 + $0x9] sm:$0xf]
        %v1012 = vpack.c.bf16 %v1011, %v1010
        %s1013 = scalar_lea.vmem %s2, 12
        %v1014 = vld [vmem:[%s1013] sm:$0xf]
        %v1015 = vld [vmem:[%s1013 + $0x4] sm:$0xf]
        %v1016 = vld [vmem:[%s1013 + $0x8] sm:$0xf]
        %v1020 = vunpack.c.l.b16 %v1014
        %v1021 = vunpack.c.l.b16 %v1015
        %v1022 = vunpack.c.l.b16 %v1016
        %v1023 = vpack.c.b16 %v1021, %v1020
        %v1024 = vpack.c.b16 %v1022, %v1022
        %v1027 = vsel %vm375, %v1012, 0
        %v1030 = vsel %vm986, %v1024, 0
        %1032 = vmatpush.bf16.msra.mxu0 0
        %1033 = vmatpush.bf16.msra.mxu0 0
        %1034 = vmatpush.bf16.msra.mxu0 0
        %1035 = vmatpush.bf16.msra.mxu0 0
        %1036 = vmatpush.bf16.msra.mxu0 0
        %1037 = vmatpush.bf16.msra.mxu0 0
        %1038 = vmatpush.bf16.msra.mxu0 %v1030
        %1039 = vmatpush.bf16.msra.mxu0 %v1023
        %1040 = vmatmul.bf16.gmra.mxu0 %v1027
        %v1041 = vpop.f32.mrf.mxu0
        %v1042 = vadd.f32 0.0, %v1041
        %v1043 = vpop.f32.mrf.mxu0
        %v1044 = vadd.f32 0.0, %v1043
        %1045 = vdwg.mxu0
        %v1046 = vadd.f32 %v1008, %v1042
        %v1047 = vadd.f32 %v1009, %v1044
        %1048 = vst.msk [vmem:[#allocation3] sm:$0xff] %vm408, %v1046
        %1049 = vst.msk [vmem:[#allocation3 + $0x8] sm:$0xf] %vm964, %v1047
        %v1050 = vld [vmem:[#allocation3] sm:$0xff]
        %v1051 = vld [vmem:[#allocation3 + $0x8] sm:$0xf]
        %v1052 = vld [vmem:[#allocation2 + $0x2] sm:$0xff]
        %v1053 = vld [vmem:[#allocation2 + $0xa] sm:$0xf]
        %v1054 = vpack.c.bf16 %v1053, %v1052
        %s1055 = scalar_lea.vmem %s2, 24
        %v1056 = vld [vmem:[%s1055] sm:$0xf]
        %v1057 = vld [vmem:[%s1055 + $0x4] sm:$0xf]
        %v1058 = vld [vmem:[%s1055 + $0x8] sm:$0xf]
        %v1062 = vunpack.c.l.b16 %v1056
        %v1063 = vunpack.c.l.b16 %v1057
        %v1064 = vunpack.c.l.b16 %v1058
        %v1065 = vpack.c.b16 %v1063, %v1062
        %v1066 = vpack.c.b16 %v1064, %v1064
        %v1069 = vsel %vm375, %v1054, 0
        %v1072 = vsel %vm986, %v1066, 0
        %1074 = vmatpush.bf16.msra.mxu0 0
        %1075 = vmatpush.bf16.msra.mxu0 0
        %1076 = vmatpush.bf16.msra.mxu0 0
        %1077 = vmatpush.bf16.msra.mxu0 0
        %1078 = vmatpush.bf16.msra.mxu0 0
        %1079 = vmatpush.bf16.msra.mxu0 0
        %1080 = vmatpush.bf16.msra.mxu0 %v1072
        %1081 = vmatpush.bf16.msra.mxu0 %v1065
        %1082 = vmatmul.bf16.gmra.mxu0 %v1069
        %v1083 = vpop.f32.mrf.mxu0
        %v1084 = vadd.f32 0.0, %v1083
        %v1085 = vpop.f32.mrf.mxu0
        %v1086 = vadd.f32 0.0, %v1085
        %1087 = vdwg.mxu0
        %v1088 = vadd.f32 %v1050, %v1084
        %v1089 = vadd.f32 %v1051, %v1086
        %1090 = vst.msk [vmem:[#allocation3] sm:$0xff] %vm408, %v1088
        %1091 = vst.msk [vmem:[#allocation3 + $0x8] sm:$0xf] %vm964, %v1089
        %v1092 = vld [vmem:[#allocation3] sm:$0xff]
        %v1093 = vld [vmem:[#allocation3 + $0x8] sm:$0xf]
        %v1094 = vld [vmem:[#allocation2 + $0x8] sm:$0xff]
        %v1095 = vld [vmem:[#allocation2 + $0x10] sm:$0xf]
        %v1096 = vpack.c.bf16 %v1095, %v1094
        %s1097 = scalar_lea.vmem %s2, 36
        %v1098 = vld [vmem:[%s1097] sm:$0xf]
        %v1099 = vld [vmem:[%s1097 + $0x4] sm:$0xf]
        %v1100 = vld [vmem:[%s1097 + $0x8] sm:$0xf]
        %v1104 = vunpack.c.l.b16 %v1098
        %v1105 = vunpack.c.l.b16 %v1099
        %v1106 = vunpack.c.l.b16 %v1100
        %v1107 = vpack.c.b16 %v1105, %v1104
        %v1108 = vpack.c.b16 %v1106, %v1106
        %v1111 = vsel %vm375, %v1096, 0
        %v1114 = vsel %vm986, %v1108, 0
        %1116 = vmatpush.bf16.msra.mxu0 0
        %1117 = vmatpush.bf16.msra.mxu0 0
        %1118 = vmatpush.bf16.msra.mxu0 0
        %1119 = vmatpush.bf16.msra.mxu0 0
        %1120 = vmatpush.bf16.msra.mxu0 0
        %1121 = vmatpush.bf16.msra.mxu0 0
        %1122 = vmatpush.bf16.msra.mxu0 %v1114
        %1123 = vmatpush.bf16.msra.mxu0 %v1107
        %1124 = vmatmul.bf16.gmra.mxu0 %v1111
        %v1125 = vpop.f32.mrf.mxu0
        %v1126 = vadd.f32 0.0, %v1125
        %v1127 = vpop.f32.mrf.mxu0
        %v1128 = vadd.f32 0.0, %v1127
        %1129 = vdwg.mxu0
        %v1130 = vadd.f32 %v1092, %v1126
        %v1131 = vadd.f32 %v1093, %v1128
        %1132 = vst.msk [vmem:[#allocation3] sm:$0xff] %vm408, %v1130
        %1133 = vst.msk [vmem:[#allocation3 + $0x8] sm:$0xf] %vm964, %v1131
        %v1134 = vld [vmem:[#allocation3] sm:$0xff]
        %v1135 = vld [vmem:[#allocation3 + $0x8] sm:$0xf]
        %v1136 = vld [vmem:[#allocation2 + $0x9] sm:$0xff]
        %v1137 = vld [vmem:[#allocation2 + $0x11] sm:$0xf]
        %v1138 = vpack.c.bf16 %v1137, %v1136
        %s1139 = scalar_lea.vmem %s2, 48
        %v1140 = vld [vmem:[%s1139] sm:$0xf]
        %v1141 = vld [vmem:[%s1139 + $0x4] sm:$0xf]
        %v1142 = vld [vmem:[%s1139 + $0x8] sm:$0xf]
        %v1146 = vunpack.c.l.b16 %v1140
        %v1147 = vunpack.c.l.b16 %v1141
        %v1148 = vunpack.c.l.b16 %v1142
        %v1149 = vpack.c.b16 %v1147, %v1146
        %v1150 = vpack.c.b16 %v1148, %v1148
        %v1153 = vsel %vm375, %v1138, 0
        %v1156 = vsel %vm986, %v1150, 0
        %1158 = vmatpush.bf16.msra.mxu0 0
        %1159 = vmatpush.bf16.msra.mxu0 0
        %1160 = vmatpush.bf16.msra.mxu0 0
        %1161 = vmatpush.bf16.msra.mxu0 0
        %1162 = vmatpush.bf16.msra.mxu0 0
        %1163 = vmatpush.bf16.msra.mxu0 0
        %1164 = vmatpush.bf16.msra.mxu0 %v1156
        %1165 = vmatpush.bf16.msra.mxu0 %v1149
        %1166 = vmatmul.bf16.gmra.mxu0 %v1153
        %v1167 = vpop.f32.mrf.mxu0
        %v1168 = vadd.f32 0.0, %v1167
        %v1169 = vpop.f32.mrf.mxu0
        %v1170 = vadd.f32 0.0, %v1169
        %1171 = vdwg.mxu0
        %v1172 = vadd.f32 %v1134, %v1168
        %v1173 = vadd.f32 %v1135, %v1170
        %1174 = vst.msk [vmem:[#allocation3] sm:$0xff] %vm408, %v1172
        %1175 = vst.msk [vmem:[#allocation3 + $0x8] sm:$0xf] %vm964, %v1173
        %v1176 = vld [vmem:[#allocation3] sm:$0xff]
        %v1177 = vld [vmem:[#allocation3 + $0x8] sm:$0xf]
        %v1178 = vld [vmem:[#allocation2 + $0xa] sm:$0xff]
        %v1179 = vld [vmem:[#allocation2 + $0x12] sm:$0xf]
        %v1180 = vpack.c.bf16 %v1179, %v1178
        %s1181 = scalar_lea.vmem %s2, 60
        %v1182 = vld [vmem:[%s1181] sm:$0xf]
        %v1183 = vld [vmem:[%s1181 + $0x4] sm:$0xf]
        %v1184 = vld [vmem:[%s1181 + $0x8] sm:$0xf]
        %v1188 = vunpack.c.l.b16 %v1182
        %v1189 = vunpack.c.l.b16 %v1183
        %v1190 = vunpack.c.l.b16 %v1184
        %v1191 = vpack.c.b16 %v1189, %v1188
        %v1192 = vpack.c.b16 %v1190, %v1190
        %v1195 = vsel %vm375, %v1180, 0
        %v1198 = vsel %vm986, %v1192, 0
        %1200 = vmatpush.bf16.msra.mxu0 0
        %1201 = vmatpush.bf16.msra.mxu0 0
        %1202 = vmatpush.bf16.msra.mxu0 0
        %1203 = vmatpush.bf16.msra.mxu0 0
        %1204 = vmatpush.bf16.msra.mxu0 0
        %1205 = vmatpush.bf16.msra.mxu0 0
        %1206 = vmatpush.bf16.msra.mxu0 %v1198
        %1207 = vmatpush.bf16.msra.mxu0 %v1191
        %1208 = vmatmul.bf16.gmra.mxu0 %v1195
        %v1209 = vpop.f32.mrf.mxu0
        %v1210 = vadd.f32 0.0, %v1209
        %v1211 = vpop.f32.mrf.mxu0
        %v1212 = vadd.f32 0.0, %v1211
        %1213 = vdwg.mxu0
        %v1214 = vadd.f32 %v1176, %v1210
        %v1215 = vadd.f32 %v1177, %v1212
        %1216 = vst.msk [vmem:[#allocation3] sm:$0xff] %vm408, %v1214
        %1217 = vst.msk [vmem:[#allocation3 + $0x8] sm:$0xf] %vm964, %v1215
        %v1218 = vld [vmem:[#allocation3] sm:$0xff]
        %v1219 = vld [vmem:[#allocation3 + $0x8] sm:$0xf]
        %v1220 = vld [vmem:[#allocation2 + $0x10] sm:$0xff]
        %v1221 = vld [vmem:[#allocation2 + $0x18] sm:$0xf]
        %v1222 = vpack.c.bf16 %v1221, %v1220
        %s1223 = scalar_lea.vmem %s2, 72
        %v1224 = vld [vmem:[%s1223] sm:$0xf]
        %v1225 = vld [vmem:[%s1223 + $0x4] sm:$0xf]
        %v1226 = vld [vmem:[%s1223 + $0x8] sm:$0xf]
        %v1230 = vunpack.c.l.b16 %v1224
        %v1231 = vunpack.c.l.b16 %v1225
        %v1232 = vunpack.c.l.b16 %v1226
        %v1233 = vpack.c.b16 %v1231, %v1230
        %v1234 = vpack.c.b16 %v1232, %v1232
        %v1237 = vsel %vm375, %v1222, 0
        %v1240 = vsel %vm986, %v1234, 0
        %1242 = vmatpush.bf16.msra.mxu0 0
        %1243 = vmatpush.bf16.msra.mxu0 0
        %1244 = vmatpush.bf16.msra.mxu0 0
        %1245 = vmatpush.bf16.msra.mxu0 0
        %1246 = vmatpush.bf16.msra.mxu0 0
        %1247 = vmatpush.bf16.msra.mxu0 0
        %1248 = vmatpush.bf16.msra.mxu0 %v1240
        %1249 = vmatpush.bf16.msra.mxu0 %v1233
        %1250 = vmatmul.bf16.gmra.mxu0 %v1237
        %v1251 = vpop.f32.mrf.mxu0
        %v1252 = vadd.f32 0.0, %v1251
        %v1253 = vpop.f32.mrf.mxu0
        %v1254 = vadd.f32 0.0, %v1253
        %1255 = vdwg.mxu0
        %v1256 = vadd.f32 %v1218, %v1252
        %v1257 = vadd.f32 %v1219, %v1254
        %1258 = vst.msk [vmem:[#allocation3] sm:$0xff] %vm408, %v1256
        %1259 = vst.msk [vmem:[#allocation3 + $0x8] sm:$0xf] %vm964, %v1257
        %v1260 = vld [vmem:[#allocation3] sm:$0xff]
        %v1261 = vld [vmem:[#allocation3 + $0x8] sm:$0xf]
        %v1262 = vld [vmem:[#allocation2 + $0x11] sm:$0xff]
        %v1263 = vld [vmem:[#allocation2 + $0x19] sm:$0xf]
        %v1264 = vpack.c.bf16 %v1263, %v1262
        %s1265 = scalar_lea.vmem %s2, 84
        %v1266 = vld [vmem:[%s1265] sm:$0xf]
        %v1267 = vld [vmem:[%s1265 + $0x4] sm:$0xf]
        %v1268 = vld [vmem:[%s1265 + $0x8] sm:$0xf]
        %v1272 = vunpack.c.l.b16 %v1266
        %v1273 = vunpack.c.l.b16 %v1267
        %v1274 = vunpack.c.l.b16 %v1268
        %v1275 = vpack.c.b16 %v1273, %v1272
        %v1276 = vpack.c.b16 %v1274, %v1274
        %v1279 = vsel %vm375, %v1264, 0
        %v1282 = vsel %vm986, %v1276, 0
        %1284 = vmatpush.bf16.msra.mxu0 0
        %1285 = vmatpush.bf16.msra.mxu0 0
        %1286 = vmatpush.bf16.msra.mxu0 0
        %1287 = vmatpush.bf16.msra.mxu0 0
        %1288 = vmatpush.bf16.msra.mxu0 0
        %1289 = vmatpush.bf16.msra.mxu0 0
        %1290 = vmatpush.bf16.msra.mxu0 %v1282
        %1291 = vmatpush.bf16.msra.mxu0 %v1275
        %1292 = vmatmul.bf16.gmra.mxu0 %v1279
        %v1293 = vpop.f32.mrf.mxu0
        %v1294 = vadd.f32 0.0, %v1293
        %v1295 = vpop.f32.mrf.mxu0
        %v1296 = vadd.f32 0.0, %v1295
        %1297 = vdwg.mxu0
        %v1298 = vadd.f32 %v1260, %v1294
        %v1299 = vadd.f32 %v1261, %v1296
        %1300 = vst.msk [vmem:[#allocation3] sm:$0xff] %vm408, %v1298
        %1301 = vst.msk [vmem:[#allocation3 + $0x8] sm:$0xf] %vm964, %v1299
        %v1302 = vld [vmem:[#allocation3] sm:$0xff]
        %v1303 = vld [vmem:[#allocation3 + $0x8] sm:$0xf]
        %v1304 = vld [vmem:[#allocation2 + $0x12] sm:$0xff]
        %v1305 = vld [vmem:[#allocation2 + $0x1a] sm:$0xf]
        %v1306 = vpack.c.bf16 %v1305, %v1304
        %s1307 = scalar_lea.vmem %s2, 96
        %v1308 = vld [vmem:[%s1307] sm:$0xf]
        %v1309 = vld [vmem:[%s1307 + $0x4] sm:$0xf]
        %v1310 = vld [vmem:[%s1307 + $0x8] sm:$0xf]
        %v1314 = vunpack.c.l.b16 %v1308
        %v1315 = vunpack.c.l.b16 %v1309
        %v1316 = vunpack.c.l.b16 %v1310
        %v1317 = vpack.c.b16 %v1315, %v1314
        %v1318 = vpack.c.b16 %v1316, %v1316
        %v1321 = vsel %vm375, %v1306, 0
        %v1324 = vsel %vm986, %v1318, 0
        %1326 = vmatpush.bf16.msra.mxu0 0
        %1327 = vmatpush.bf16.msra.mxu0 0
        %1328 = vmatpush.bf16.msra.mxu0 0
        %1329 = vmatpush.bf16.msra.mxu0 0
        %1330 = vmatpush.bf16.msra.mxu0 0
        %1331 = vmatpush.bf16.msra.mxu0 0
        %1332 = vmatpush.bf16.msra.mxu0 %v1324
        %1333 = vmatpush.bf16.msra.mxu0 %v1317
        %1334 = vmatmul.bf16.gmra.mxu0 %v1321
        %v1335 = vpop.f32.mrf.mxu0
        %v1336 = vadd.f32 0.0, %v1335
        %v1337 = vpop.f32.mrf.mxu0
        %v1338 = vadd.f32 0.0, %v1337
        %1339 = vdwg.mxu0
        %v1340 = vadd.f32 %v1302, %v1336
        %v1341 = vadd.f32 %v1303, %v1338
        %1342 = vst.msk [vmem:[#allocation3] sm:$0xff] %vm408, %v1340
        %1343 = vst.msk [vmem:[#allocation3 + $0x8] sm:$0xf] %vm964, %v1341
        %v1344 = vld [vmem:[#allocation3] sm:$0xff]
        %v1345 = vld [vmem:[#allocation3 + $0x8] sm:$0xf]
        %vm1346 = vcmp.ge.f32.partialorder %v1344, 0.0
        %vm1347 = vcmp.ge.f32.partialorder %v1345, 0.0
        %v1348 = vstv %s369
        %v1349 = vmul.f32 %v1348, %v1344
        %v1350 = vmul.f32 %v1348, %v1345
        %v1351 = vsel %vm1346, %v1344, %v1349
        %v1352 = vsel %vm1347, %v1345, %v1350
        %v1353 = vpack.c.bf16 %v1352, %v1351
        %v1354 = vld [vmem:[%s4] sm:$0xf]
        %v1355 = vld [vmem:[%s4 + $0x4] sm:$0xf]
        %v1356 = vld [vmem:[%s4 + $0x8] sm:$0xf]
        %v1357 = vld [vmem:[%s4 + $0xc] sm:$0xf]
        %v1358 = vld [vmem:[%s881] sm:$0xff]
        %v1359 = vld [vmem:[%s881 + $0x8] sm:$0xf]
        %v1360 = vpack.c.bf16 %v1359, %v1358
        %v1361 = vld [vmem:[%s3] sm:$0xf]
        %v1362 = vld [vmem:[%s3 + $0x4] sm:$0xf]
        %v1363 = vld [vmem:[%s3 + $0x8] sm:$0xf]
        %v1364 = vld [vmem:[%s3 + $0xc] sm:$0xf]
        %v1369 = vunpack.c.l.b16 %v1361
        %v1370 = vunpack.c.l.b16 %v1362
        %v1371 = vunpack.c.l.b16 %v1363
        %v1372 = vunpack.c.l.b16 %v1364
        %v1373 = vpack.c.b16 %v1370, %v1369
        %v1374 = vpack.c.b16 %v1372, %v1371
        %v1378 = vsel %vm408, %v1360, 0
        %1380 = vmatpush.bf16.msra.mxu0 0
        %1381 = vmatpush.bf16.msra.mxu0 0
        %1382 = vmatpush.bf16.msra.mxu0 0
        %1383 = vmatpush.bf16.msra.mxu0 0
        %1384 = vmatpush.bf16.msra.mxu0 0
        %1385 = vmatpush.bf16.msra.mxu0 0
        %1386 = vmatpush.bf16.msra.mxu0 %v1374
        %1387 = vmatpush.bf16.msra.mxu0 %v1373
        %1388 = vmatmul.bf16.gmra.mxu0 %v1378
        %v1389 = vpop.f32.mrf.mxu0
        %v1390 = vadd.f32 0.0, %v1389
        %v1391 = vpop.f32.mrf.mxu0
        %v1392 = vadd.f32 0.0, %v1391
        %1393 = vdwg.mxu0
        %v1398 = vunpack.c.l.b16 %v1354
        %v1399 = vunpack.c.l.b16 %v1355
        %v1400 = vunpack.c.l.b16 %v1356
        %v1401 = vunpack.c.l.b16 %v1357
        %v1402 = vpack.c.b16 %v1399, %v1398
        %v1403 = vpack.c.b16 %v1401, %v1400
        %v1407 = vsel %vm408, %v1353, 0
        %1409 = vmatpush.bf16.msra.mxu0 0
        %1410 = vmatpush.bf16.msra.mxu0 0
        %1411 = vmatpush.bf16.msra.mxu0 0
        %1412 = vmatpush.bf16.msra.mxu0 0
        %1413 = vmatpush.bf16.msra.mxu0 0
        %1414 = vmatpush.bf16.msra.mxu0 0
        %1415 = vmatpush.bf16.msra.mxu0 %v1403
        %1416 = vmatpush.bf16.msra.mxu0 %v1402
        %1417 = vmatmul.bf16.gmra.mxu0 %v1407
        %v1418 = vpop.f32.mrf.mxu0
        %v1419 = vadd.f32 %v1390, %v1418
        %v1420 = vpop.f32.mrf.mxu0
        %v1421 = vadd.f32 %v1392, %v1420
        %1422 = vdwg.mxu0
        %v1423 = vld [vmem:[%s7] sm:$0x1]
        %v1425 = vperm.slane %v1423, 0
        %v1427 = vadd.f32 %v1419, %v1425
        %v1428 = vadd.f32 %v1421, %v1425
        %vm1429 = vcmask 130048
        %1430 = vst.msk [vmem:[#allocation4] sm:$0xff] %vm1429, %v1427
        %vm1431 = vcmask 125952
        %1432 = vst.msk [vmem:[#allocation4 + $0x8] sm:$0xf] %vm1431, %v1428
        %v1433 = vld [vmem:[#allocation4] ss:$2 sm:$0x3]
        %s1434 = scalar_lea.vmem [#allocation4], 1
        %v1435 = vld [vmem:[%s1434] ss:$2 sm:$0x3]
        %v1436 = vadd.f32 %v1433, %v1435
        %s1437 = scalar_lea.vmem [#allocation4], 8
        %v1438 = vld [vmem:[%s1437] ss:$2 sm:$0x3]
        %v1439 = vadd.f32 %v1436, %v1438
        %s1440 = scalar_lea.vmem [#allocation4], 9
        %v1441 = vld [vmem:[%s1440] ss:$2 sm:$0x3]
        %v1442 = vadd.f32 %v1439, %v1441
        %vm1443 = vcmask 123904
        %1444 = vst.msk [vmem:[%s366] sm:$0x3] %vm1443, %v1442
        %p1445 = scmp.lt.s32.totalorder %s25, 1
        %s1446 = scalar_select %p1445, %s25, 1
        %p1447 = scmp.lt.s32.totalorder %s26, 1
        %s1448 = scalar_select %p1447, %s26, 1
        %s1449 = smul.addr %s1446, 2
        %s1450 = sadd.s32 %s1448, %s1449
        %s1451 = smul.addr %s1450, 2
        %s1452 = scalar_lea.vmem %s9, %s1451
        // Predicated region
        $region61: #{residual_block_forward.1} parent=55 // pred_check
          %p1453 = pneg %p247
        $region62: #{residual_block_forward.1} parent=55 // pred_check_branch
          %1455 = sbr.rel (%p1453) target = $region64
        $region63: #{residual_block_forward.1} parent=55 // pred_region
          _
        $region64: #{residual_block_forward.1} parent=55 // pred_fallthru
          _
      $region56: #{residual_block_forward.1} parent=5 // pred_fallthru
        _
      %p1456 = scmp.le.s32.totalorder 2, %s16
      // Predicated region
      $region65: #{residual_block_forward.1} parent=5 // pred_check
        %p1457 = pneg %p1456
      $region66: #{residual_block_forward.1} parent=5 // pred_check_branch
        %1459 = sbr.rel (%p1457) target = $region68
      $region67: #{residual_block_forward.1} parent=5 // pred_region
        %s1460 = ssub.s32 %s16, 2
        // Predicated region
        $region69: #{residual_block_forward.1} parent=67 // pred_check
          %p1461 = pneg %p253
        $region70: #{residual_block_forward.1} parent=67 // pred_check_branch
          %1463 = sbr.rel (%p1461) target = $region72
        $region71: #{residual_block_forward.1} parent=67 // pred_region
          %p1464 = scmp.lt.s32.totalorder %s27, 1
          %s1465 = scalar_select %p1464, %s27, 1
          %p1466 = scmp.lt.s32.totalorder %s28, 1
          %s1467 = scalar_select %p1466, %s28, 1
          %s1468 = smul.addr %s1465, 2
          %s1469 = sadd.s32 %s1467, %s1468
          %s1470 = smul.addr %s1469, 2
          %s1471 = scalar_lea.vmem %s9, %s1470
        $region72: #{residual_block_forward.1} parent=67 // pred_fallthru
          _
      $region68: #{residual_block_forward.1} parent=5 // pred_fallthru
        _
    $region6: #{residual_block_forward.1} parent=1 // loop_footer
      %s20 = sadd.s32 1, %s16
    $region7: #{residual_block_forward.1} parent=1 // loop_footer_branch
      %15 = sbr.rel target = $region3
    $region8: #{residual_block_forward.1} parent=1 // loop_exit
      _
    %1472 = vsyncpa [#allocation6], 1
    %s1473 = scalar_lea.sflag [#allocation6], 1
    %1474 = vsyncpa %s1473, 1

</llo_original>
